<compile_context>
chip_gen: v7x
topology: tpu7x:2x2x1
jax: 0.10.0
libtpu: 0.0.40
codegen_flags: <defaults>
</compile_context>

<pallas_src>
import functools

import jax
import jax.numpy as jnp
from jax.experimental import pallas as pl
from jax.experimental.pallas import tpu as pltpu

HEAD_PAD = 128  # lane-dense padded head width


# ---------------------------------------------------------------------------
# Pallas kernel: fused  (Linear+BN-folded -> ReLU) x 2  ->  Linear head
# Operates on one [TB, K] batch tile per grid step; weights are VMEM-resident.
# ---------------------------------------------------------------------------
def fcnn_kernel(x_ref, w1_ref, b1_ref, w2_ref, b2_ref, w3_ref, b3_ref, out_ref):
    # layer 1: Linear(1024 -> 512) [BN folded] + ReLU
    h = jnp.dot(x_ref[...], w1_ref[...], preferred_element_type=jnp.float32)
    h = jnp.maximum(h + b1_ref[...], 0.0)

    # layer 2: Linear(512 -> 256) [BN folded] + ReLU
    h = jnp.dot(h.astype(w2_ref.dtype), w2_ref[...], preferred_element_type=jnp.float32)
    h = jnp.maximum(h + b2_ref[...], 0.0)

    # head: Linear(256 -> 128-padded)  (true classes live in lanes [:5])
    out = jnp.dot(h.astype(w3_ref.dtype), w3_ref[...], preferred_element_type=jnp.float32)
    out_ref[...] = (out + b3_ref[...]).astype(out_ref.dtype)


def _round_up(n, m):
    return ((n + m - 1) // m) * m


# ---------------------------------------------------------------------------
# One-time parameter preprocessing: fold BN into Linear, cast to bf16, pad head.
# ---------------------------------------------------------------------------
def fold_params(params, eps=1e-5, compute_dtype=jnp.bfloat16, head_pad=HEAD_PAD):
    (w1, b1, g1, be1, m1, v1,
     w2, b2, g2, be2, m2, v2,
     w3, b3) = params

    s1 = g1 * jax.lax.rsqrt(v1 + eps)
    w1f = (w1 * s1).astype(compute_dtype)
    b1f = ((b1 - m1) * s1 + be1).astype(jnp.float32)

    s2 = g2 * jax.lax.rsqrt(v2 + eps)
    w2f = (w2 * s2).astype(compute_dtype)
    b2f = ((b2 - m2) * s2 + be2).astype(jnp.float32)

    nc = w3.shape[1]
    w3p = jnp.zeros((w3.shape[0], head_pad), jnp.float32).at[:, :nc].set(w3)
    w3p = w3p.astype(compute_dtype)
    b3p = jnp.zeros((1, head_pad), jnp.float32).at[:, :nc].set(b3)

    return (w1f, b1f, w2f, b2f, w3p, b3p)


# ---------------------------------------------------------------------------
# Forward wrapper: input adaptation (glue) + batch-tiled pallas_call
# ---------------------------------------------------------------------------
@functools.partial(jax.jit, static_argnames=("input_dim", "num_classes"))
def fcnn_forward(x, folded_params, input_dim=1024, num_classes=5):
    w1f, b1f, w2f, b2f, w3p, b3p = folded_params
    batch_size = x.shape[0]

    # ---- input adaptation (same branches as the PyTorch forward) -------------
    if x.ndim == 4:                       # [B, C, H, W]  -> flatten
        x = x.reshape(batch_size, -1)
    elif x.ndim == 3:                     # [B, S, D]     -> mean over seq
        x = jnp.mean(x, axis=1)
    elif x.ndim != 2:
        raise ValueError(f"unsupported input rank: {x.shape}")

    d = x.shape[1]
    if d > input_dim:                     # truncate features
        x = x[:, :input_dim]
    elif d < input_dim:                   # zero-pad semantics without copying x:
        w1f = w1f[:d, :]                  # x_pad @ w1 == x @ w1[:d]

    K = x.shape[1]
    x = x.astype(w1f.dtype)               # bf16 MXU inputs

    # ---- batch tiling ---------------------------------------------------------
    # big tiles amortize the ~0.35us per-step overhead; weights are resident anyway
    TB = min(512, _round_up(batch_size, 8))
    Bp = _round_up(batch_size, TB)
    if Bp != batch_size:
        x = jnp.pad(x, ((0, Bp - batch_size), (0, 0)))

    H1, H2, NP = w1f.shape[1], w2f.shape[1], w3p.shape[1]
    grid = (Bp // TB,)

    cost = pl.CostEstimate(
        flops=2 * Bp * (K * H1 + H1 * H2 + H2 * NP),
        transcendentals=0,
        bytes_accessed=(
            (w1f.size + w2f.size + w3p.size) * 2        # bf16 weights
            + (b1f.size + b2f.size + b3p.size) * 4      # f32 biases
            + Bp * K * 2                                # bf16 activations in
            + Bp * NP * 4                               # f32 logits out
        ),
    )

    def resident(shape):
        # weights/biases: same block every grid step -> stays VMEM-resident
        return pl.BlockSpec(shape, lambda i: (0, 0))

    out = pl.pallas_call(
        fcnn_kernel,
        out_shape=jax.ShapeDtypeStruct((Bp, NP), jnp.float32),
        grid=grid,
        in_specs=[
            pl.BlockSpec((TB, K), lambda i: (i, 0)),     # batch-tiled activations
            resident(w1f.shape), resident(b1f.shape),
            resident(w2f.shape), resident(b2f.shape),
            resident(w3p.shape), resident(b3p.shape),
        ],
        out_specs=pl.BlockSpec((TB, NP), lambda i: (i, 0)),
        compiler_params=pltpu.CompilerParams(
            dimension_semantics=("parallel",),
            vmem_limit_bytes=32 << 20,
        ),
        cost_estimate=cost,
    )(x, w1f, b1f, w2f, b2f, w3p, b3p)

    return out[:batch_size, :num_classes]


# ---------------------------------------------------------------------------
# Deterministic parameter initialization (shapes per FCNN.__init__ defaults)
# ---------------------------------------------------------------------------
def init_params(key, input_dim=1024, hidden_dims=(512, 256), num_classes=5):
    dims = [input_dim] + list(hidden_dims)
    keys = jax.random.split(key, 2 * (len(dims) - 1) + 2)
    params = []
    ki = 0
    for i in range(len(dims) - 1):
        fan_in, fan_out = dims[i], dims[i + 1]
        bound = 1.0 / jnp.sqrt(fan_in)
        w = jax.random.uniform(keys[ki], (fan_in, fan_out), jnp.float32, -bound, bound)
        ki += 1
        b = jax.random.uniform(keys[ki], (1, fan_out), jnp.float32, -bound, bound)
        ki += 1
        # BatchNorm1d defaults: gamma=1, beta=0, running_mean=0, running_var=1
        gamma = jnp.ones((1, fan_out), jnp.float32)
        beta = jnp.zeros((1, fan_out), jnp.float32)
        rmean = jnp.zeros((1, fan_out), jnp.float32)
        rvar = jnp.ones((1, fan_out), jnp.float32)
        params += [w, b, gamma, beta, rmean, rvar]
    fan_in = dims[-1]
    bound = 1.0 / jnp.sqrt(fan_in)
    w3 = jax.random.uniform(keys[ki], (fan_in, num_classes), jnp.float32, -bound, bound)
    ki += 1
    b3 = jax.random.uniform(keys[ki], (1, num_classes), jnp.float32, -bound, bound)
    params += [w3, b3]
    return tuple(params)


if __name__ == "__main__":
    key = jax.random.PRNGKey(0)
    k_params, k_x = jax.random.split(key)

    params = init_params(k_params, input_dim=1024, hidden_dims=(512, 256), num_classes=5)
    folded = fold_params(params)

    # 4-D spectrogram-style input: [B, C, H, W] = [2, 4, 16, 16]  ->  C*H*W = 1024
    x = jax.random.normal(k_x, (2, 4, 16, 16), dtype=jnp.float32)

    out = fcnn_forward(x, folded, input_dim=1024, num_classes=5)
    jax.block_until_ready(out)

    assert out.shape == (2, 5), out.shape

    # correctness check vs. plain-JAX f32 reference (bf16 weights -> loose tol)
    def ref_forward(x, params):
        (w1, b1, g1, be1, m1, v1, w2, b2, g2, be2, m2, v2, w3, b3) = params
        h = x.reshape(x.shape[0], -1)
        h = h @ w1 + b1
        h = (h - m1) * g1 / jnp.sqrt(v1 + 1e-5) + be1
        h = jnp.maximum(h, 0.0)
        h = h @ w2 + b2
        h = (h - m2) * g2 / jnp.sqrt(v2 + 1e-5) + be2
        h = jnp.maximum(h, 0.0)
        return h @ w3 + b3

    ref = ref_forward(x, params)
    max_err = float(jnp.max(jnp.abs(out - ref)))
    assert jnp.all(jnp.isfinite(out)), "non-finite outputs"
    assert jnp.allclose(out, ref, atol=5e-2, rtol=5e-2), max_err

    print("KERNEL_OK")
</pallas_src>

<mosaic_0001>
module attributes {stable_mosaic.version = 11 : i64} {
  func.func @fcnn_kernel(%arg0: i32, %arg1: memref<8x1024xbf16, #tpu.memory_space<vmem>>, %arg2: memref<1024x512xbf16, #tpu.memory_space<vmem>>, %arg3: memref<1x512xf32, #tpu.memory_space<vmem>>, %arg4: memref<512x256xbf16, #tpu.memory_space<vmem>>, %arg5: memref<1x256xf32, #tpu.memory_space<vmem>>, %arg6: memref<256x128xbf16, #tpu.memory_space<vmem>>, %arg7: memref<1x128xf32, #tpu.memory_space<vmem>>, %arg8: memref<8x128xf32, #tpu.memory_space<vmem>>) attributes {dimension_semantics = [#tpu.dimension_semantics<parallel>], iteration_bounds = array<i64: 1>, scalar_prefetch = 0 : i64, scratch_operands = 0 : i64, tpu.core_type = #tpu.core_type<tc>, window_params = [{transform_indices = @transform_0, window_bounds = array<i64: 8, 1024>}, {pipeline_mode = #tpu.pipeline_mode<synchronous>, transform_indices = @transform_1, window_bounds = array<i64: 1024, 512>}, {pipeline_mode = #tpu.pipeline_mode<synchronous>, transform_indices = @transform_2, window_bounds = array<i64: 1, 512>}, {pipeline_mode = #tpu.pipeline_mode<synchronous>, transform_indices = @transform_3, window_bounds = array<i64: 512, 256>}, {pipeline_mode = #tpu.pipeline_mode<synchronous>, transform_indices = @transform_4, window_bounds = array<i64: 1, 256>}, {pipeline_mode = #tpu.pipeline_mode<synchronous>, transform_indices = @transform_5, window_bounds = array<i64: 256, 128>}, {pipeline_mode = #tpu.pipeline_mode<synchronous>, transform_indices = @transform_6, window_bounds = array<i64: 1, 128>}, {transform_indices = @transform_7, window_bounds = array<i64: 8, 128>}]} {
    %c0 = arith.constant 0 : index
    %c0_0 = arith.constant 0 : index
    %0 = vector.load %arg1[%c0, %c0_0] : memref<8x1024xbf16, #tpu.memory_space<vmem>>, vector<8x1024xbf16>
    %c0_1 = arith.constant 0 : index
    %c0_2 = arith.constant 0 : index
    %1 = vector.load %arg2[%c0_1, %c0_2] : memref<1024x512xbf16, #tpu.memory_space<vmem>>, vector<1024x512xbf16>
    %cst = arith.constant dense<0.000000e+00> : vector<8x512xf32>
    %2 = tpu.matmul %0, %1, %cst {dimension_numbers = #tpu.dot_dimension_numbers<[1], [0], [0], [1], [0, 0, 1, 1], [], []>} : vector<8x1024xbf16>, vector<1024x512xbf16>, vector<8x512xf32> -> vector<8x512xf32>
    %c0_3 = arith.constant 0 : index
    %c0_4 = arith.constant 0 : index
    %3 = vector.load %arg3[%c0_3, %c0_4] : memref<1x512xf32, #tpu.memory_space<vmem>>, vector<1x512xf32>
    %4 = vector.broadcast %3 : vector<1x512xf32> to vector<8x512xf32>
    %5 = arith.addf %2, %4 : vector<8x512xf32>
    %cst_5 = arith.constant 0.000000e+00 : f32
    %6 = vector.broadcast %cst_5 : f32 to vector<8x512xf32>
    %7 = arith.maximumf %5, %6 : vector<8x512xf32>
    %8 = arith.truncf %7 : vector<8x512xf32> to vector<8x512xbf16>
    %c0_6 = arith.constant 0 : index
    %c0_7 = arith.constant 0 : index
    %9 = vector.load %arg4[%c0_6, %c0_7] : memref<512x256xbf16, #tpu.memory_space<vmem>>, vector<512x256xbf16>
    %cst_8 = arith.constant dense<0.000000e+00> : vector<8x256xf32>
    %10 = tpu.matmul %8, %9, %cst_8 {dimension_numbers = #tpu.dot_dimension_numbers<[1], [0], [0], [1], [0, 0, 1, 1], [], []>} : vector<8x512xbf16>, vector<512x256xbf16>, vector<8x256xf32> -> vector<8x256xf32>
    %c0_9 = arith.constant 0 : index
    %c0_10 = arith.constant 0 : index
    %11 = vector.load %arg5[%c0_9, %c0_10] : memref<1x256xf32, #tpu.memory_space<vmem>>, vector<1x256xf32>
    %12 = vector.broadcast %11 : vector<1x256xf32> to vector<8x256xf32>
    %13 = arith.addf %10, %12 : vector<8x256xf32>
    %cst_11 = arith.constant 0.000000e+00 : f32
    %14 = vector.broadcast %cst_11 : f32 to vector<8x256xf32>
    %15 = arith.maximumf %13, %14 : vector<8x256xf32>
    %16 = arith.truncf %15 : vector<8x256xf32> to vector<8x256xbf16>
    %c0_12 = arith.constant 0 : index
    %c0_13 = arith.constant 0 : index
    %17 = vector.load %arg6[%c0_12, %c0_13] : memref<256x128xbf16, #tpu.memory_space<vmem>>, vector<256x128xbf16>
    %cst_14 = arith.constant dense<0.000000e+00> : vector<8x128xf32>
    %18 = tpu.matmul %16, %17, %cst_14 {dimension_numbers = #tpu.dot_dimension_numbers<[1], [0], [0], [1], [0, 0, 1, 1], [], []>} : vector<8x256xbf16>, vector<256x128xbf16>, vector<8x128xf32> -> vector<8x128xf32>
    %c0_15 = arith.constant 0 : index
    %c0_16 = arith.constant 0 : index
    %19 = vector.load %arg7[%c0_15, %c0_16] : memref<1x128xf32, #tpu.memory_space<vmem>>, vector<1x128xf32>
    %20 = vector.broadcast %19 : vector<1x128xf32> to vector<8x128xf32>
    %21 = arith.addf %18, %20 : vector<8x128xf32>
    %c0_17 = arith.constant 0 : index
    %c0_18 = arith.constant 0 : index
    %22 = vector.load %arg8[%c0_17, %c0_18] : memref<8x128xf32, #tpu.memory_space<vmem>>, vector<8x128xf32>
    tpu.vector_store %arg8[%c0_17, %c0_18], %21 {strides = array<i32>} : memref<8x128xf32, #tpu.memory_space<vmem>>, vector<8x128xf32>,
    return
  }
  func.func @transform_0(%arg0: i32) -> (i32, i32) {
    %c0_i32 = arith.constant 0 : i32
    %c0_i32_0 = arith.constant 0 : i32
    return %arg0, %c0_i32 : i32, i32
  }
  func.func @transform_1(%arg0: i32) -> (i32, i32) {
    %c0_i32 = arith.constant 0 : i32
    %c0_i32_0 = arith.constant 0 : i32
    %c0_i32_1 = arith.constant 0 : i32
    return %c0_i32, %c0_i32_0 : i32, i32
  }
  func.func @transform_2(%arg0: i32) -> (i32, i32) {
    %c0_i32 = arith.constant 0 : i32
    %c0_i32_0 = arith.constant 0 : i32
    %c0_i32_1 = arith.constant 0 : i32
    return %c0_i32, %c0_i32_0 : i32, i32
  }
  func.func @transform_3(%arg0: i32) -> (i32, i32) {
    %c0_i32 = arith.constant 0 : i32
    %c0_i32_0 = arith.constant 0 : i32
    %c0_i32_1 = arith.constant 0 : i32
    return %c0_i32, %c0_i32_0 : i32, i32
  }
  func.func @transform_4(%arg0: i32) -> (i32, i32) {
    %c0_i32 = arith.constant 0 : i32
    %c0_i32_0 = arith.constant 0 : i32
    %c0_i32_1 = arith.constant 0 : i32
    return %c0_i32, %c0_i32_0 : i32, i32
  }
  func.func @transform_5(%arg0: i32) -> (i32, i32) {
    %c0_i32 = arith.constant 0 : i32
    %c0_i32_0 = arith.constant 0 : i32
    %c0_i32_1 = arith.constant 0 : i32
    return %c0_i32, %c0_i32_0 : i32, i32
  }
  func.func @transform_6(%arg0: i32) -> (i32, i32) {
    %c0_i32 = arith.constant 0 : i32
    %c0_i32_0 = arith.constant 0 : i32
    %c0_i32_1 = arith.constant 0 : i32
    return %c0_i32, %c0_i32_0 : i32, i32
  }
  func.func @transform_7(%arg0: i32) -> (i32, i32) {
    %c0_i32 = arith.constant 0 : i32
    %c0_i32_0 = arith.constant 0 : i32
    return %arg0, %c0_i32 : i32, i32
  }
}

</mosaic_0001>

<llo_original>
// kernel: fcnn_forward.1
$region0: #{fcnn_forward.1}
  #allocation0 [shape = 'u32[]', space=smem, size = 0x4, offset = 0x4, fixed_abs, tag = 'smem constant byte address 0x4 - core index']
  #allocation1 [shape = 'u32[144,128]{1,0:T(1,128)}', space=vmem, size = 0x12000, scoped, tag = 'internal scratch']
  %s0 = inlined_call_operand.vmem [shape: bf16[8,1024], index: 0, kind: input, shape index: {}]
  %s1 = inlined_call_operand.hbm [shape: bf16[1024,512], index: 1, kind: input, shape index: {}]
  %s2 = inlined_call_operand.vmem [shape: f32[1,512], index: 2, kind: input, shape index: {}]
  %s3 = inlined_call_operand.hbm [shape: bf16[512,256], index: 3, kind: input, shape index: {}]
  %s4 = inlined_call_operand.vmem [shape: f32[1,256], index: 4, kind: input, shape index: {}]
  %s5 = inlined_call_operand.vmem [shape: bf16[256,128], index: 5, kind: input, shape index: {}]
  %s6 = inlined_call_operand.vmem [shape: f32[1,128], index: 6, kind: input, shape index: {}]
  %s7 = inlined_call_operand.vmem [shape: f32[8,128], index: 7, kind: output, shape index: {}]
  %s8 = sld [smem:[#allocation0]]
  $region46: #{fcnn_forward.1} parent=0
    _
  %s10 = ssub.s32 1, %s8
  %s11 = scalar_select 0, %s10, %s8
  $region1: #{fcnn_forward.1} parent=0
    #allocation2 [shape = 'u8[1048576]{0}', space=vmem, size = 0x100000, scoped, tag = 'input window, operand 1, single buffered']
    #allocation3 [shape = 's32[1]{0}', space=sflag, size = 0x4, scoped, tag = 'scoped memory for fcnn_forward.1']
    #allocation4 [shape = 'u8[262144]{0}', space=vmem, size = 0x40000, scoped, tag = 'input window, operand 3, single buffered']
    #allocation5 [shape = 's32[1]{0}', space=sflag, size = 0x4, scoped, tag = 'scoped memory for fcnn_forward.1']
    %12 = vsyncpa [#allocation3], 0
    %13 = vsyncpa [#allocation5], 0
    // Predicated region
    $region2: #{fcnn_forward.1} parent=1 // pred_check
      _
    $region3: #{fcnn_forward.1} parent=1 // pred_check_branch
      %15 = sbr.rel (0) target = $region5
    $region4: #{fcnn_forward.1} parent=1 // pred_region
      _
    $region5: #{fcnn_forward.1} parent=1 // pred_fallthru
      _
    // Predicated region
    $region6: #{fcnn_forward.1} parent=1 // pred_check
      _
    $region7: #{fcnn_forward.1} parent=1 // pred_check_branch
      %17 = sbr.rel (0) target = $region9
    $region8: #{fcnn_forward.1} parent=1 // pred_region
      %s19 = ssub.s32 32768, 32768
      %20 = vsyncadd [#allocation3], %s19
      %s21 = sshll.u32 [#allocation2], 4
      %s22 = int_to_ptr.vmem [resolvable:$true] %s21
      %27 = dma.hbm_to_vmem [thread:$0]  %s1, 32768, %s22, [#allocation3], 256, 256, 16
    $region9: #{fcnn_forward.1} parent=1 // pred_fallthru
      _
    // Predicated region
    $region10: #{fcnn_forward.1} parent=1 // pred_check
      _
    $region11: #{fcnn_forward.1} parent=1 // pred_check_branch
      %29 = sbr.rel (0) target = $region13
    $region12: #{fcnn_forward.1} parent=1 // pred_region
      _
    $region13: #{fcnn_forward.1} parent=1 // pred_fallthru
      _
    // Predicated region
    $region14: #{fcnn_forward.1} parent=1 // pred_check
      _
    $region15: #{fcnn_forward.1} parent=1 // pred_check_branch
      %31 = sbr.rel (0) target = $region17
    $region16: #{fcnn_forward.1} parent=1 // pred_region
      %s33 = ssub.s32 8192, 8192
      %34 = vsyncadd [#allocation5], %s33
      %s35 = sshll.u32 [#allocation4], 4
      %s36 = int_to_ptr.vmem [resolvable:$true] %s35
      %41 = dma.hbm_to_vmem [thread:$0]  %s3, 8192, %s36, [#allocation5], 128, 128, 8
    $region17: #{fcnn_forward.1} parent=1 // pred_fallthru
      _
    // Predicated region
    $region18: #{fcnn_forward.1} parent=1 // pred_check
      _
    $region19: #{fcnn_forward.1} parent=1 // pred_check_branch
      %43 = sbr.rel (0) target = $region21
    $region20: #{fcnn_forward.1} parent=1 // pred_region
      _
    $region21: #{fcnn_forward.1} parent=1 // pred_fallthru
      _
    // Predicated region
    $region22: #{fcnn_forward.1} parent=1 // pred_check
      _
    $region23: #{fcnn_forward.1} parent=1 // pred_check_branch
      %45 = sbr.rel (0) target = $region25
    $region24: #{fcnn_forward.1} parent=1 // pred_region
      _
    $region25: #{fcnn_forward.1} parent=1 // pred_fallthru
      _
    // Predicated region
    $region26: #{fcnn_forward.1} parent=1 // pred_check
      _
    $region27: #{fcnn_forward.1} parent=1 // pred_check_branch
      %47 = sbr.rel (0) target = $region29
    $region28: #{fcnn_forward.1} parent=1 // pred_region
      _
    $region29: #{fcnn_forward.1} parent=1 // pred_fallthru
      _
    // Predicated region
    $region30: #{fcnn_forward.1} parent=1 // pred_check
      _
    $region31: #{fcnn_forward.1} parent=1 // pred_check_branch
      %49 = sbr.rel (0) target = $region33
    $region32: #{fcnn_forward.1} parent=1 // pred_region
      %50 = dma.done [#allocation3], 32768
    $region33: #{fcnn_forward.1} parent=1 // pred_fallthru
      _
    // Predicated region
    $region34: #{fcnn_forward.1} parent=1 // pred_check
      _
    $region35: #{fcnn_forward.1} parent=1 // pred_check_branch
      %52 = sbr.rel (0) target = $region37
    $region36: #{fcnn_forward.1} parent=1 // pred_region
      %53 = dma.done [#allocation5], 8192
    $region37: #{fcnn_forward.1} parent=1 // pred_fallthru
      _
    %v55 = vld [vmem:[%s0] sm:$0xff]
    %v56 = vld [vmem:[%s0 + $0x8] sm:$0xff]
    %v57 = vld [vmem:[%s0 + $0x10] sm:$0xff]
    %v58 = vld [vmem:[%s0 + $0x18] sm:$0xff]
    %v59 = vld [vmem:[#allocation2] sm:$0xff]
    %v60 = vld [vmem:[#allocation2 + $0x8] sm:$0xff]
    %v61 = vld [vmem:[#allocation2 + $0x10] sm:$0xff]
    %v62 = vld [vmem:[#allocation2 + $0x18] sm:$0xff]
    %v63 = vld [vmem:[#allocation2 + $0x20] sm:$0xff]
    %v64 = vld [vmem:[#allocation2 + $0x28] sm:$0xff]
    %v65 = vld [vmem:[#allocation2 + $0x30] sm:$0xff]
    %v66 = vld [vmem:[#allocation2 + $0x38] sm:$0xff]
    %v67 = vld [vmem:[#allocation2 + $0x40] sm:$0xff]
    %v68 = vld [vmem:[#allocation2 + $0x48] sm:$0xff]
    %v69 = vld [vmem:[#allocation2 + $0x50] sm:$0xff]
    %v70 = vld [vmem:[#allocation2 + $0x58] sm:$0xff]
    %v71 = vld [vmem:[#allocation2 + $0x60] sm:$0xff]
    %v72 = vld [vmem:[#allocation2 + $0x68] sm:$0xff]
    %v73 = vld [vmem:[#allocation2 + $0x70] sm:$0xff]
    %v74 = vld [vmem:[#allocation2 + $0x78] sm:$0xff]
    %v75 = vld [vmem:[#allocation2 + $0x80] sm:$0xff]
    %v76 = vld [vmem:[#allocation2 + $0x88] sm:$0xff]
    %v77 = vld [vmem:[#allocation2 + $0x90] sm:$0xff]
    %v78 = vld [vmem:[#allocation2 + $0x98] sm:$0xff]
    %v79 = vld [vmem:[#allocation2 + $0xa0] sm:$0xff]
    %v80 = vld [vmem:[#allocation2 + $0xa8] sm:$0xff]
    %v81 = vld [vmem:[#allocation2 + $0xb0] sm:$0xff]
    %v82 = vld [vmem:[#allocation2 + $0xb8] sm:$0xff]
    %v83 = vld [vmem:[#allocation2 + $0xc0] sm:$0xff]
    %v84 = vld [vmem:[#allocation2 + $0xc8] sm:$0xff]
    %v85 = vld [vmem:[#allocation2 + $0xd0] sm:$0xff]
    %v86 = vld [vmem:[#allocation2 + $0xd8] sm:$0xff]
    %v87 = vld [vmem:[#allocation2 + $0xe0] sm:$0xff]
    %v88 = vld [vmem:[#allocation2 + $0xe8] sm:$0xff]
    %v89 = vld [vmem:[#allocation2 + $0xf0] sm:$0xff]
    %v90 = vld [vmem:[#allocation2 + $0xf8] sm:$0xff]
    %v91 = vld [vmem:[#allocation2 + $0x100] sm:$0xff]
    %v92 = vld [vmem:[#allocation2 + $0x108] sm:$0xff]
    %v93 = vld [vmem:[#allocation2 + $0x110] sm:$0xff]
    %v94 = vld [vmem:[#allocation2 + $0x118] sm:$0xff]
    %v95 = vld [vmem:[#allocation2 + $0x120] sm:$0xff]
    %v96 = vld [vmem:[#allocation2 + $0x128] sm:$0xff]
    %v97 = vld [vmem:[#allocation2 + $0x130] sm:$0xff]
    %v98 = vld [vmem:[#allocation2 + $0x138] sm:$0xff]
    %v99 = vld [vmem:[#allocation2 + $0x140] sm:$0xff]
    %v100 = vld [vmem:[#allocation2 + $0x148] sm:$0xff]
    %v101 = vld [vmem:[#allocation2 + $0x150] sm:$0xff]
    %v102 = vld [vmem:[#allocation2 + $0x158] sm:$0xff]
    %v103 = vld [vmem:[#allocation2 + $0x160] sm:$0xff]
    %v104 = vld [vmem:[#allocation2 + $0x168] sm:$0xff]
    %v105 = vld [vmem:[#allocation2 + $0x170] sm:$0xff]
    %v106 = vld [vmem:[#allocation2 + $0x178] sm:$0xff]
    %v107 = vld [vmem:[#allocation2 + $0x180] sm:$0xff]
    %v108 = vld [vmem:[#allocation2 + $0x188] sm:$0xff]
    %v109 = vld [vmem:[#allocation2 + $0x190] sm:$0xff]
    %v110 = vld [vmem:[#allocation2 + $0x198] sm:$0xff]
    %v111 = vld [vmem:[#allocation2 + $0x1a0] sm:$0xff]
    %v112 = vld [vmem:[#allocation2 + $0x1a8] sm:$0xff]
    %v113 = vld [vmem:[#allocation2 + $0x1b0] sm:$0xff]
    %v114 = vld [vmem:[#allocation2 + $0x1b8] sm:$0xff]
    %v115 = vld [vmem:[#allocation2 + $0x1c0] sm:$0xff]
    %v116 = vld [vmem:[#allocation2 + $0x1c8] sm:$0xff]
    %v117 = vld [vmem:[#allocation2 + $0x1d0] sm:$0xff]
    %v118 = vld [vmem:[#allocation2 + $0x1d8] sm:$0xff]
    %v119 = vld [vmem:[#allocation2 + $0x1e0] sm:$0xff]
    %v120 = vld [vmem:[#allocation2 + $0x1e8] sm:$0xff]
    %v121 = vld [vmem:[#allocation2 + $0x1f0] sm:$0xff]
    %v122 = vld [vmem:[#allocation2 + $0x1f8] sm:$0xff]
    %v123 = vld [vmem:[#allocation2 + $0x200] sm:$0xff]
    %v124 = vld [vmem:[#allocation2 + $0x208] sm:$0xff]
    %v125 = vld [vmem:[#allocation2 + $0x210] sm:$0xff]
    %v126 = vld [vmem:[#allocation2 + $0x218] sm:$0xff]
    %v127 = vld [vmem:[#allocation2 + $0x220] sm:$0xff]
    %v128 = vld [vmem:[#allocation2 + $0x228] sm:$0xff]
    %v129 = vld [vmem:[#allocation2 + $0x230] sm:$0xff]
    %v130 = vld [vmem:[#allocation2 + $0x238] sm:$0xff]
    %v131 = vld [vmem:[#allocation2 + $0x240] sm:$0xff]
    %v132 = vld [vmem:[#allocation2 + $0x248] sm:$0xff]
    %v133 = vld [vmem:[#allocation2 + $0x250] sm:$0xff]
    %v134 = vld [vmem:[#allocation2 + $0x258] sm:$0xff]
    %v135 = vld [vmem:[#allocation2 + $0x260] sm:$0xff]
    %v136 = vld [vmem:[#allocation2 + $0x268] sm:$0xff]
    %v137 = vld [vmem:[#allocation2 + $0x270] sm:$0xff]
    %v138 = vld [vmem:[#allocation2 + $0x278] sm:$0xff]
    %v139 = vld [vmem:[#allocation2 + $0x280] sm:$0xff]
    %v140 = vld [vmem:[#allocation2 + $0x288] sm:$0xff]
    %v141 = vld [vmem:[#allocation2 + $0x290] sm:$0xff]
    %v142 = vld [vmem:[#allocation2 + $0x298] sm:$0xff]
    %v143 = vld [vmem:[#allocation2 + $0x2a0] sm:$0xff]
    %v144 = vld [vmem:[#allocation2 + $0x2a8] sm:$0xff]
    %v145 = vld [vmem:[#allocation2 + $0x2b0] sm:$0xff]
    %v146 = vld [vmem:[#allocation2 + $0x2b8] sm:$0xff]
    %v147 = vld [vmem:[#allocation2 + $0x2c0] sm:$0xff]
    %v148 = vld [vmem:[#allocation2 + $0x2c8] sm:$0xff]
    %v149 = vld [vmem:[#allocation2 + $0x2d0] sm:$0xff]
    %v150 = vld [vmem:[#allocation2 + $0x2d8] sm:$0xff]
    %v151 = vld [vmem:[#allocation2 + $0x2e0] sm:$0xff]
    %v152 = vld [vmem:[#allocation2 + $0x2e8] sm:$0xff]
    %v153 = vld [vmem:[#allocation2 + $0x2f0] sm:$0xff]
    %v154 = vld [vmem:[#allocation2 + $0x2f8] sm:$0xff]
    %v155 = vld [vmem:[#allocation2 + $0x300] sm:$0xff]
    %v156 = vld [vmem:[#allocation2 + $0x308] sm:$0xff]
    %v157 = vld [vmem:[#allocation2 + $0x310] sm:$0xff]
    %v158 = vld [vmem:[#allocation2 + $0x318] sm:$0xff]
    %v159 = vld [vmem:[#allocation2 + $0x320] sm:$0xff]
    %v160 = vld [vmem:[#allocation2 + $0x328] sm:$0xff]
    %v161 = vld [vmem:[#allocation2 + $0x330] sm:$0xff]
    %v162 = vld [vmem:[#allocation2 + $0x338] sm:$0xff]
    %v163 = vld [vmem:[#allocation2 + $0x340] sm:$0xff]
    %v164 = vld [vmem:[#allocation2 + $0x348] sm:$0xff]
    %v165 = vld [vmem:[#allocation2 + $0x350] sm:$0xff]
    %v166 = vld [vmem:[#allocation2 + $0x358] sm:$0xff]
    %v167 = vld [vmem:[#allocation2 + $0x360] sm:$0xff]
    %v168 = vld [vmem:[#allocation2 + $0x368] sm:$0xff]
    %v169 = vld [vmem:[#allocation2 + $0x370] sm:$0xff]
    %v170 = vld [vmem:[#allocation2 + $0x378] sm:$0xff]
    %v171 = vld [vmem:[#allocation2 + $0x380] sm:$0xff]
    %v172 = vld [vmem:[#allocation2 + $0x388] sm:$0xff]
    %v173 = vld [vmem:[#allocation2 + $0x390] sm:$0xff]
    %v174 = vld [vmem:[#allocation2 + $0x398] sm:$0xff]
    %v175 = vld [vmem:[#allocation2 + $0x3a0] sm:$0xff]
    %v176 = vld [vmem:[#allocation2 + $0x3a8] sm:$0xff]
    %v177 = vld [vmem:[#allocation2 + $0x3b0] sm:$0xff]
    %v178 = vld [vmem:[#allocation2 + $0x3b8] sm:$0xff]
    %v179 = vld [vmem:[#allocation2 + $0x3c0] sm:$0xff]
    %v180 = vld [vmem:[#allocation2 + $0x3c8] sm:$0xff]
    %v181 = vld [vmem:[#allocation2 + $0x3d0] sm:$0xff]
    %v182 = vld [vmem:[#allocation2 + $0x3d8] sm:$0xff]
    %v183 = vld [vmem:[#allocation2 + $0x3e0] sm:$0xff]
    %v184 = vld [vmem:[#allocation2 + $0x3e8] sm:$0xff]
    %v185 = vld [vmem:[#allocation2 + $0x3f0] sm:$0xff]
    %v186 = vld [vmem:[#allocation2 + $0x3f8] sm:$0xff]
    %v187 = vld [vmem:[#allocation2 + $0x400] sm:$0xff]
    %v188 = vld [vmem:[#allocation2 + $0x408] sm:$0xff]
    %v189 = vld [vmem:[#allocation2 + $0x410] sm:$0xff]
    %v190 = vld [vmem:[#allocation2 + $0x418] sm:$0xff]
    %v191 = vld [vmem:[#allocation2 + $0x420] sm:$0xff]
    %v192 = vld [vmem:[#allocation2 + $0x428] sm:$0xff]
    %v193 = vld [vmem:[#allocation2 + $0x430] sm:$0xff]
    %v194 = vld [vmem:[#allocation2 + $0x438] sm:$0xff]
    %v195 = vld [vmem:[#allocation2 + $0x440] sm:$0xff]
    %v196 = vld [vmem:[#allocation2 + $0x448] sm:$0xff]
    %v197 = vld [vmem:[#allocation2 + $0x450] sm:$0xff]
    %v198 = vld [vmem:[#allocation2 + $0x458] sm:$0xff]
    %v199 = vld [vmem:[#allocation2 + $0x460] sm:$0xff]
    %v200 = vld [vmem:[#allocation2 + $0x468] sm:$0xff]
    %v201 = vld [vmem:[#allocation2 + $0x470] sm:$0xff]
    %v202 = vld [vmem:[#allocation2 + $0x478] sm:$0xff]
    %v203 = vld [vmem:[#allocation2 + $0x480] sm:$0xff]
    %v204 = vld [vmem:[#allocation2 + $0x488] sm:$0xff]
    %v205 = vld [vmem:[#allocation2 + $0x490] sm:$0xff]
    %v206 = vld [vmem:[#allocation2 + $0x498] sm:$0xff]
    %v207 = vld [vmem:[#allocation2 + $0x4a0] sm:$0xff]
    %v208 = vld [vmem:[#allocation2 + $0x4a8] sm:$0xff]
    %v209 = vld [vmem:[#allocation2 + $0x4b0] sm:$0xff]
    %v210 = vld [vmem:[#allocation2 + $0x4b8] sm:$0xff]
    %v211 = vld [vmem:[#allocation2 + $0x4c0] sm:$0xff]
    %v212 = vld [vmem:[#allocation2 + $0x4c8] sm:$0xff]
    %v213 = vld [vmem:[#allocation2 + $0x4d0] sm:$0xff]
    %v214 = vld [vmem:[#allocation2 + $0x4d8] sm:$0xff]
    %v215 = vld [vmem:[#allocation2 + $0x4e0] sm:$0xff]
    %v216 = vld [vmem:[#allocation2 + $0x4e8] sm:$0xff]
    %v217 = vld [vmem:[#allocation2 + $0x4f0] sm:$0xff]
    %v218 = vld [vmem:[#allocation2 + $0x4f8] sm:$0xff]
    %v219 = vld [vmem:[#allocation2 + $0x500] sm:$0xff]
    %v220 = vld [vmem:[#allocation2 + $0x508] sm:$0xff]
    %v221 = vld [vmem:[#allocation2 + $0x510] sm:$0xff]
    %v222 = vld [vmem:[#allocation2 + $0x518] sm:$0xff]
    %v223 = vld [vmem:[#allocation2 + $0x520] sm:$0xff]
    %v224 = vld [vmem:[#allocation2 + $0x528] sm:$0xff]
    %v225 = vld [vmem:[#allocation2 + $0x530] sm:$0xff]
    %v226 = vld [vmem:[#allocation2 + $0x538] sm:$0xff]
    %v227 = vld [vmem:[#allocation2 + $0x540] sm:$0xff]
    %v228 = vld [vmem:[#allocation2 + $0x548] sm:$0xff]
    %v229 = vld [vmem:[#allocation2 + $0x550] sm:$0xff]
    %v230 = vld [vmem:[#allocation2 + $0x558] sm:$0xff]
    %v231 = vld [vmem:[#allocation2 + $0x560] sm:$0xff]
    %v232 = vld [vmem:[#allocation2 + $0x568] sm:$0xff]
    %v233 = vld [vmem:[#allocation2 + $0x570] sm:$0xff]
    %v234 = vld [vmem:[#allocation2 + $0x578] sm:$0xff]
    %v235 = vld [vmem:[#allocation2 + $0x580] sm:$0xff]
    %v236 = vld [vmem:[#allocation2 + $0x588] sm:$0xff]
    %v237 = vld [vmem:[#allocation2 + $0x590] sm:$0xff]
    %v238 = vld [vmem:[#allocation2 + $0x598] sm:$0xff]
    %v239 = vld [vmem:[#allocation2 + $0x5a0] sm:$0xff]
    %v240 = vld [vmem:[#allocation2 + $0x5a8] sm:$0xff]
    %v241 = vld [vmem:[#allocation2 + $0x5b0] sm:$0xff]
    %v242 = vld [vmem:[#allocation2 + $0x5b8] sm:$0xff]
    %v243 = vld [vmem:[#allocation2 + $0x5c0] sm:$0xff]
    %v244 = vld [vmem:[#allocation2 + $0x5c8] sm:$0xff]
    %v245 = vld [vmem:[#allocation2 + $0x5d0] sm:$0xff]
    %v246 = vld [vmem:[#allocation2 + $0x5d8] sm:$0xff]
    %v247 = vld [vmem:[#allocation2 + $0x5e0] sm:$0xff]
    %v248 = vld [vmem:[#allocation2 + $0x5e8] sm:$0xff]
    %v249 = vld [vmem:[#allocation2 + $0x5f0] sm:$0xff]
    %v250 = vld [vmem:[#allocation2 + $0x5f8] sm:$0xff]
    %v251 = vld [vmem:[#allocation2 + $0x600] sm:$0xff]
    %v252 = vld [vmem:[#allocation2 + $0x608] sm:$0xff]
    %v253 = vld [vmem:[#allocation2 + $0x610] sm:$0xff]
    %v254 = vld [vmem:[#allocation2 + $0x618] sm:$0xff]
    %v255 = vld [vmem:[#allocation2 + $0x620] sm:$0xff]
    %v256 = vld [vmem:[#allocation2 + $0x628] sm:$0xff]
    %v257 = vld [vmem:[#allocation2 + $0x630] sm:$0xff]
    %v258 = vld [vmem:[#allocation2 + $0x638] sm:$0xff]
    %v259 = vld [vmem:[#allocation2 + $0x640] sm:$0xff]
    %v260 = vld [vmem:[#allocation2 + $0x648] sm:$0xff]
    %v261 = vld [vmem:[#allocation2 + $0x650] sm:$0xff]
    %v262 = vld [vmem:[#allocation2 + $0x658] sm:$0xff]
    %v263 = vld [vmem:[#allocation2 + $0x660] sm:$0xff]
    %v264 = vld [vmem:[#allocation2 + $0x668] sm:$0xff]
    %v265 = vld [vmem:[#allocation2 + $0x670] sm:$0xff]
    %v266 = vld [vmem:[#allocation2 + $0x678] sm:$0xff]
    %v267 = vld [vmem:[#allocation2 + $0x680] sm:$0xff]
    %v268 = vld [vmem:[#allocation2 + $0x688] sm:$0xff]
    %v269 = vld [vmem:[#allocation2 + $0x690] sm:$0xff]
    %v270 = vld [vmem:[#allocation2 + $0x698] sm:$0xff]
    %v271 = vld [vmem:[#allocation2 + $0x6a0] sm:$0xff]
    %v272 = vld [vmem:[#allocation2 + $0x6a8] sm:$0xff]
    %v273 = vld [vmem:[#allocation2 + $0x6b0] sm:$0xff]
    %v274 = vld [vmem:[#allocation2 + $0x6b8] sm:$0xff]
    %v275 = vld [vmem:[#allocation2 + $0x6c0] sm:$0xff]
    %v276 = vld [vmem:[#allocation2 + $0x6c8] sm:$0xff]
    %v277 = vld [vmem:[#allocation2 + $0x6d0] sm:$0xff]
    %v278 = vld [vmem:[#allocation2 + $0x6d8] sm:$0xff]
    %v279 = vld [vmem:[#allocation2 + $0x6e0] sm:$0xff]
    %v280 = vld [vmem:[#allocation2 + $0x6e8] sm:$0xff]
    %v281 = vld [vmem:[#allocation2 + $0x6f0] sm:$0xff]
    %v282 = vld [vmem:[#allocation2 + $0x6f8] sm:$0xff]
    %v283 = vld [vmem:[#allocation2 + $0x700] sm:$0xff]
    %v284 = vld [vmem:[#allocation2 + $0x708] sm:$0xff]
    %v285 = vld [vmem:[#allocation2 + $0x710] sm:$0xff]
    %v286 = vld [vmem:[#allocation2 + $0x718] sm:$0xff]
    %v287 = vld [vmem:[#allocation2 + $0x720] sm:$0xff]
    %v288 = vld [vmem:[#allocation2 + $0x728] sm:$0xff]
    %v289 = vld [vmem:[#allocation2 + $0x730] sm:$0xff]
    %v290 = vld [vmem:[#allocation2 + $0x738] sm:$0xff]
    %v291 = vld [vmem:[#allocation2 + $0x740] sm:$0xff]
    %v292 = vld [vmem:[#allocation2 + $0x748] sm:$0xff]
    %v293 = vld [vmem:[#allocation2 + $0x750] sm:$0xff]
    %v294 = vld [vmem:[#allocation2 + $0x758] sm:$0xff]
    %v295 = vld [vmem:[#allocation2 + $0x760] sm:$0xff]
    %v296 = vld [vmem:[#allocation2 + $0x768] sm:$0xff]
    %v297 = vld [vmem:[#allocation2 + $0x770] sm:$0xff]
    %v298 = vld [vmem:[#allocation2 + $0x778] sm:$0xff]
    %v299 = vld [vmem:[#allocation2 + $0x780] sm:$0xff]
    %v300 = vld [vmem:[#allocation2 + $0x788] sm:$0xff]
    %v301 = vld [vmem:[#allocation2 + $0x790] sm:$0xff]
    %v302 = vld [vmem:[#allocation2 + $0x798] sm:$0xff]
    %v303 = vld [vmem:[#allocation2 + $0x7a0] sm:$0xff]
    %v304 = vld [vmem:[#allocation2 + $0x7a8] sm:$0xff]
    %v305 = vld [vmem:[#allocation2 + $0x7b0] sm:$0xff]
    %v306 = vld [vmem:[#allocation2 + $0x7b8] sm:$0xff]
    %v307 = vld [vmem:[#allocation2 + $0x7c0] sm:$0xff]
    %v308 = vld [vmem:[#allocation2 + $0x7c8] sm:$0xff]
    %v309 = vld [vmem:[#allocation2 + $0x7d0] sm:$0xff]
    %v310 = vld [vmem:[#allocation2 + $0x7d8] sm:$0xff]
    %v311 = vld [vmem:[#allocation2 + $0x7e0] sm:$0xff]
    %v312 = vld [vmem:[#allocation2 + $0x7e8] sm:$0xff]
    %v313 = vld [vmem:[#allocation2 + $0x7f0] sm:$0xff]
    %v314 = vld [vmem:[#allocation2 + $0x7f8] sm:$0xff]
    %v315 = vld [vmem:[%s2] sm:$0xf]
    %v317 = vlaneseq
    %v318 = vshrl.u32 %v317, 7
    %v319 = vsub.s32 0, %v318
    %v320 = vrot.slane %v315, %v319
    %v321 = vlaneseq
    %v322 = vshrl.u32 %v321, 7
    %v323 = vsub.s32 1, %v322
    %v324 = vrot.slane %v315, %v323
    %v325 = vlaneseq
    %v326 = vshrl.u32 %v325, 7
    %v327 = vsub.s32 2, %v326
    %v328 = vrot.slane %v315, %v327
    %v329 = vlaneseq
    %v330 = vshrl.u32 %v329, 7
    %v331 = vsub.s32 3, %v330
    %v332 = vrot.slane %v315, %v331
    %v341 = vunpack.c.l.b16 %v55
    %v342 = vunpack.c.h.b16 %v55
    %v343 = vunpack.c.l.b16 %v56
    %v344 = vunpack.c.h.b16 %v56
    %v345 = vunpack.c.l.b16 %v57
    %v346 = vunpack.c.h.b16 %v57
    %v347 = vunpack.c.l.b16 %v58
    %v348 = vunpack.c.h.b16 %v58
    %v349 = vpack.c.b16 %v341, %v341
    %v350 = vpack.c.b16 %v342, %v342
    %v351 = vpack.c.b16 %v343, %v343
    %v352 = vpack.c.b16 %v344, %v344
    %v353 = vpack.c.b16 %v345, %v345
    %v354 = vpack.c.b16 %v346, %v346
    %v355 = vpack.c.b16 %v347, %v347
    %v356 = vpack.c.b16 %v348, %v348
    %v621 = vunpack.c.l.b16 %v59
    %v622 = vunpack.c.h.b16 %v59
    %v623 = vunpack.c.l.b16 %v60
    %v624 = vunpack.c.h.b16 %v60
    %v625 = vunpack.c.l.b16 %v61
    %v626 = vunpack.c.h.b16 %v61
    %v627 = vunpack.c.l.b16 %v62
    %v628 = vunpack.c.h.b16 %v62
    %v629 = vunpack.c.l.b16 %v63
    %v630 = vunpack.c.h.b16 %v63
    %v631 = vunpack.c.l.b16 %v64
    %v632 = vunpack.c.h.b16 %v64
    %v633 = vunpack.c.l.b16 %v65
    %v634 = vunpack.c.h.b16 %v65
    %v635 = vunpack.c.l.b16 %v66
    %v636 = vunpack.c.h.b16 %v66
    %v637 = vunpack.c.l.b16 %v67
    %v638 = vunpack.c.h.b16 %v67
    %v639 = vunpack.c.l.b16 %v68
    %v640 = vunpack.c.h.b16 %v68
    %v641 = vunpack.c.l.b16 %v69
    %v642 = vunpack.c.h.b16 %v69
    %v643 = vunpack.c.l.b16 %v70
    %v644 = vunpack.c.h.b16 %v70
    %v645 = vunpack.c.l.b16 %v71
    %v646 = vunpack.c.h.b16 %v71
    %v647 = vunpack.c.l.b16 %v72
    %v648 = vunpack.c.h.b16 %v72
    %v649 = vunpack.c.l.b16 %v73
    %v650 = vunpack.c.h.b16 %v73
    %v651 = vunpack.c.l.b16 %v74
    %v652 = vunpack.c.h.b16 %v74
    %v653 = vunpack.c.l.b16 %v75
    %v654 = vunpack.c.h.b16 %v75
    %v655 = vunpack.c.l.b16 %v76
    %v656 = vunpack.c.h.b16 %v76
    %v657 = vunpack.c.l.b16 %v77
    %v658 = vunpack.c.h.b16 %v77
    %v659 = vunpack.c.l.b16 %v78
    %v660 = vunpack.c.h.b16 %v78
    %v661 = vunpack.c.l.b16 %v79
    %v662 = vunpack.c.h.b16 %v79
    %v663 = vunpack.c.l.b16 %v80
    %v664 = vunpack.c.h.b16 %v80
    %v665 = vunpack.c.l.b16 %v81
    %v666 = vunpack.c.h.b16 %v81
    %v667 = vunpack.c.l.b16 %v82
    %v668 = vunpack.c.h.b16 %v82
    %v669 = vunpack.c.l.b16 %v83
    %v670 = vunpack.c.h.b16 %v83
    %v671 = vunpack.c.l.b16 %v84
    %v672 = vunpack.c.h.b16 %v84
    %v673 = vunpack.c.l.b16 %v85
    %v674 = vunpack.c.h.b16 %v85
    %v675 = vunpack.c.l.b16 %v86
    %v676 = vunpack.c.h.b16 %v86
    %v677 = vunpack.c.l.b16 %v87
    %v678 = vunpack.c.h.b16 %v87
    %v679 = vunpack.c.l.b16 %v88
    %v680 = vunpack.c.h.b16 %v88
    %v681 = vunpack.c.l.b16 %v89
    %v682 = vunpack.c.h.b16 %v89
    %v683 = vunpack.c.l.b16 %v90
    %v684 = vunpack.c.h.b16 %v90
    %v685 = vunpack.c.l.b16 %v91
    %v686 = vunpack.c.h.b16 %v91
    %v687 = vunpack.c.l.b16 %v92
    %v688 = vunpack.c.h.b16 %v92
    %v689 = vunpack.c.l.b16 %v93
    %v690 = vunpack.c.h.b16 %v93
    %v691 = vunpack.c.l.b16 %v94
    %v692 = vunpack.c.h.b16 %v94
    %v693 = vunpack.c.l.b16 %v95
    %v694 = vunpack.c.h.b16 %v95
    %v695 = vunpack.c.l.b16 %v96
    %v696 = vunpack.c.h.b16 %v96
    %v697 = vunpack.c.l.b16 %v97
    %v698 = vunpack.c.h.b16 %v97
    %v699 = vunpack.c.l.b16 %v98
    %v700 = vunpack.c.h.b16 %v98
    %v701 = vunpack.c.l.b16 %v99
    %v702 = vunpack.c.h.b16 %v99
    %v703 = vunpack.c.l.b16 %v100
    %v704 = vunpack.c.h.b16 %v100
    %v705 = vunpack.c.l.b16 %v101
    %v706 = vunpack.c.h.b16 %v101
    %v707 = vunpack.c.l.b16 %v102
    %v708 = vunpack.c.h.b16 %v102
    %v709 = vunpack.c.l.b16 %v103
    %v710 = vunpack.c.h.b16 %v103
    %v711 = vunpack.c.l.b16 %v104
    %v712 = vunpack.c.h.b16 %v104
    %v713 = vunpack.c.l.b16 %v105
    %v714 = vunpack.c.h.b16 %v105
    %v715 = vunpack.c.l.b16 %v106
    %v716 = vunpack.c.h.b16 %v106
    %v717 = vunpack.c.l.b16 %v107
    %v718 = vunpack.c.h.b16 %v107
    %v719 = vunpack.c.l.b16 %v108
    %v720 = vunpack.c.h.b16 %v108
    %v721 = vunpack.c.l.b16 %v109
    %v722 = vunpack.c.h.b16 %v109
    %v723 = vunpack.c.l.b16 %v110
    %v724 = vunpack.c.h.b16 %v110
    %v725 = vunpack.c.l.b16 %v111
    %v726 = vunpack.c.h.b16 %v111
    %v727 = vunpack.c.l.b16 %v112
    %v728 = vunpack.c.h.b16 %v112
    %v729 = vunpack.c.l.b16 %v113
    %v730 = vunpack.c.h.b16 %v113
    %v731 = vunpack.c.l.b16 %v114
    %v732 = vunpack.c.h.b16 %v114
    %v733 = vunpack.c.l.b16 %v115
    %v734 = vunpack.c.h.b16 %v115
    %v735 = vunpack.c.l.b16 %v116
    %v736 = vunpack.c.h.b16 %v116
    %v737 = vunpack.c.l.b16 %v117
    %v738 = vunpack.c.h.b16 %v117
    %v739 = vunpack.c.l.b16 %v118
    %v740 = vunpack.c.h.b16 %v118
    %v741 = vunpack.c.l.b16 %v119
    %v742 = vunpack.c.h.b16 %v119
    %v743 = vunpack.c.l.b16 %v120
    %v744 = vunpack.c.h.b16 %v120
    %v745 = vunpack.c.l.b16 %v121
    %v746 = vunpack.c.h.b16 %v121
    %v747 = vunpack.c.l.b16 %v122
    %v748 = vunpack.c.h.b16 %v122
    %v749 = vunpack.c.l.b16 %v123
    %v750 = vunpack.c.h.b16 %v123
    %v751 = vunpack.c.l.b16 %v124
    %v752 = vunpack.c.h.b16 %v124
    %v753 = vunpack.c.l.b16 %v125
    %v754 = vunpack.c.h.b16 %v125
    %v755 = vunpack.c.l.b16 %v126
    %v756 = vunpack.c.h.b16 %v126
    %v757 = vunpack.c.l.b16 %v127
    %v758 = vunpack.c.h.b16 %v127
    %v759 = vunpack.c.l.b16 %v128
    %v760 = vunpack.c.h.b16 %v128
    %v761 = vunpack.c.l.b16 %v129
    %v762 = vunpack.c.h.b16 %v129
    %v763 = vunpack.c.l.b16 %v130
    %v764 = vunpack.c.h.b16 %v130
    %v765 = vunpack.c.l.b16 %v131
    %v766 = vunpack.c.h.b16 %v131
    %v767 = vunpack.c.l.b16 %v132
    %v768 = vunpack.c.h.b16 %v132
    %v769 = vunpack.c.l.b16 %v133
    %v770 = vunpack.c.h.b16 %v133
    %v771 = vunpack.c.l.b16 %v134
    %v772 = vunpack.c.h.b16 %v134
    %v773 = vunpack.c.l.b16 %v135
    %v774 = vunpack.c.h.b16 %v135
    %v775 = vunpack.c.l.b16 %v136
    %v776 = vunpack.c.h.b16 %v136
    %v777 = vunpack.c.l.b16 %v137
    %v778 = vunpack.c.h.b16 %v137
    %v779 = vunpack.c.l.b16 %v138
    %v780 = vunpack.c.h.b16 %v138
    %v781 = vunpack.c.l.b16 %v139
    %v782 = vunpack.c.h.b16 %v139
    %v783 = vunpack.c.l.b16 %v140
    %v784 = vunpack.c.h.b16 %v140
    %v785 = vunpack.c.l.b16 %v141
    %v786 = vunpack.c.h.b16 %v141
    %v787 = vunpack.c.l.b16 %v142
    %v788 = vunpack.c.h.b16 %v142
    %v789 = vunpack.c.l.b16 %v143
    %v790 = vunpack.c.h.b16 %v143
    %v791 = vunpack.c.l.b16 %v144
    %v792 = vunpack.c.h.b16 %v144
    %v793 = vunpack.c.l.b16 %v145
    %v794 = vunpack.c.h.b16 %v145
    %v795 = vunpack.c.l.b16 %v146
    %v796 = vunpack.c.h.b16 %v146
    %v797 = vunpack.c.l.b16 %v147
    %v798 = vunpack.c.h.b16 %v147
    %v799 = vunpack.c.l.b16 %v148
    %v800 = vunpack.c.h.b16 %v148
    %v801 = vunpack.c.l.b16 %v149
    %v802 = vunpack.c.h.b16 %v149
    %v803 = vunpack.c.l.b16 %v150
    %v804 = vunpack.c.h.b16 %v150
    %v805 = vunpack.c.l.b16 %v151
    %v806 = vunpack.c.h.b16 %v151
    %v807 = vunpack.c.l.b16 %v152
    %v808 = vunpack.c.h.b16 %v152
    %v809 = vunpack.c.l.b16 %v153
    %v810 = vunpack.c.h.b16 %v153
    %v811 = vunpack.c.l.b16 %v154
    %v812 = vunpack.c.h.b16 %v154
    %v813 = vunpack.c.l.b16 %v155
    %v814 = vunpack.c.h.b16 %v155
    %v815 = vunpack.c.l.b16 %v156
    %v816 = vunpack.c.h.b16 %v156
    %v817 = vunpack.c.l.b16 %v157
    %v818 = vunpack.c.h.b16 %v157
    %v819 = vunpack.c.l.b16 %v158
    %v820 = vunpack.c.h.b16 %v158
    %v821 = vunpack.c.l.b16 %v159
    %v822 = vunpack.c.h.b16 %v159
    %v823 = vunpack.c.l.b16 %v160
    %v824 = vunpack.c.h.b16 %v160
    %v825 = vunpack.c.l.b16 %v161
    %v826 = vunpack.c.h.b16 %v161
    %v827 = vunpack.c.l.b16 %v162
    %v828 = vunpack.c.h.b16 %v162
    %v829 = vunpack.c.l.b16 %v163
    %v830 = vunpack.c.h.b16 %v163
    %v831 = vunpack.c.l.b16 %v164
    %v832 = vunpack.c.h.b16 %v164
    %v833 = vunpack.c.l.b16 %v165
    %v834 = vunpack.c.h.b16 %v165
    %v835 = vunpack.c.l.b16 %v166
    %v836 = vunpack.c.h.b16 %v166
    %v837 = vunpack.c.l.b16 %v167
    %v838 = vunpack.c.h.b16 %v167
    %v839 = vunpack.c.l.b16 %v168
    %v840 = vunpack.c.h.b16 %v168
    %v841 = vunpack.c.l.b16 %v169
    %v842 = vunpack.c.h.b16 %v169
    %v843 = vunpack.c.l.b16 %v170
    %v844 = vunpack.c.h.b16 %v170
    %v845 = vunpack.c.l.b16 %v171
    %v846 = vunpack.c.h.b16 %v171
    %v847 = vunpack.c.l.b16 %v172
    %v848 = vunpack.c.h.b16 %v172
    %v849 = vunpack.c.l.b16 %v173
    %v850 = vunpack.c.h.b16 %v173
    %v851 = vunpack.c.l.b16 %v174
    %v852 = vunpack.c.h.b16 %v174
    %v853 = vunpack.c.l.b16 %v175
    %v854 = vunpack.c.h.b16 %v175
    %v855 = vunpack.c.l.b16 %v176
    %v856 = vunpack.c.h.b16 %v176
    %v857 = vunpack.c.l.b16 %v177
    %v858 = vunpack.c.h.b16 %v177
    %v859 = vunpack.c.l.b16 %v178
    %v860 = vunpack.c.h.b16 %v178
    %v861 = vunpack.c.l.b16 %v179
    %v862 = vunpack.c.h.b16 %v179
    %v863 = vunpack.c.l.b16 %v180
    %v864 = vunpack.c.h.b16 %v180
    %v865 = vunpack.c.l.b16 %v181
    %v866 = vunpack.c.h.b16 %v181
    %v867 = vunpack.c.l.b16 %v182
    %v868 = vunpack.c.h.b16 %v182
    %v869 = vunpack.c.l.b16 %v183
    %v870 = vunpack.c.h.b16 %v183
    %v871 = vunpack.c.l.b16 %v184
    %v872 = vunpack.c.h.b16 %v184
    %v873 = vunpack.c.l.b16 %v185
    %v874 = vunpack.c.h.b16 %v185
    %v875 = vunpack.c.l.b16 %v186
    %v876 = vunpack.c.h.b16 %v186
    %v877 = vunpack.c.l.b16 %v187
    %v878 = vunpack.c.h.b16 %v187
    %v879 = vunpack.c.l.b16 %v188
    %v880 = vunpack.c.h.b16 %v188
    %v881 = vunpack.c.l.b16 %v189
    %v882 = vunpack.c.h.b16 %v189
    %v883 = vunpack.c.l.b16 %v190
    %v884 = vunpack.c.h.b16 %v190
    %v885 = vunpack.c.l.b16 %v191
    %v886 = vunpack.c.h.b16 %v191
    %v887 = vunpack.c.l.b16 %v192
    %v888 = vunpack.c.h.b16 %v192
    %v889 = vunpack.c.l.b16 %v193
    %v890 = vunpack.c.h.b16 %v193
    %v891 = vunpack.c.l.b16 %v194
    %v892 = vunpack.c.h.b16 %v194
    %v893 = vunpack.c.l.b16 %v195
    %v894 = vunpack.c.h.b16 %v195
    %v895 = vunpack.c.l.b16 %v196
    %v896 = vunpack.c.h.b16 %v196
    %v897 = vunpack.c.l.b16 %v197
    %v898 = vunpack.c.h.b16 %v197
    %v899 = vunpack.c.l.b16 %v198
    %v900 = vunpack.c.h.b16 %v198
    %v901 = vunpack.c.l.b16 %v199
    %v902 = vunpack.c.h.b16 %v199
    %v903 = vunpack.c.l.b16 %v200
    %v904 = vunpack.c.h.b16 %v200
    %v905 = vunpack.c.l.b16 %v201
    %v906 = vunpack.c.h.b16 %v201
    %v907 = vunpack.c.l.b16 %v202
    %v908 = vunpack.c.h.b16 %v202
    %v909 = vunpack.c.l.b16 %v203
    %v910 = vunpack.c.h.b16 %v203
    %v911 = vunpack.c.l.b16 %v204
    %v912 = vunpack.c.h.b16 %v204
    %v913 = vunpack.c.l.b16 %v205
    %v914 = vunpack.c.h.b16 %v205
    %v915 = vunpack.c.l.b16 %v206
    %v916 = vunpack.c.h.b16 %v206
    %v917 = vunpack.c.l.b16 %v207
    %v918 = vunpack.c.h.b16 %v207
    %v919 = vunpack.c.l.b16 %v208
    %v920 = vunpack.c.h.b16 %v208
    %v921 = vunpack.c.l.b16 %v209
    %v922 = vunpack.c.h.b16 %v209
    %v923 = vunpack.c.l.b16 %v210
    %v924 = vunpack.c.h.b16 %v210
    %v925 = vunpack.c.l.b16 %v211
    %v926 = vunpack.c.h.b16 %v211
    %v927 = vunpack.c.l.b16 %v212
    %v928 = vunpack.c.h.b16 %v212
    %v929 = vunpack.c.l.b16 %v213
    %v930 = vunpack.c.h.b16 %v213
    %v931 = vunpack.c.l.b16 %v214
    %v932 = vunpack.c.h.b16 %v214
    %v933 = vunpack.c.l.b16 %v215
    %v934 = vunpack.c.h.b16 %v215
    %v935 = vunpack.c.l.b16 %v216
    %v936 = vunpack.c.h.b16 %v216
    %v937 = vunpack.c.l.b16 %v217
    %v938 = vunpack.c.h.b16 %v217
    %v939 = vunpack.c.l.b16 %v218
    %v940 = vunpack.c.h.b16 %v218
    %v941 = vunpack.c.l.b16 %v219
    %v942 = vunpack.c.h.b16 %v219
    %v943 = vunpack.c.l.b16 %v220
    %v944 = vunpack.c.h.b16 %v220
    %v945 = vunpack.c.l.b16 %v221
    %v946 = vunpack.c.h.b16 %v221
    %v947 = vunpack.c.l.b16 %v222
    %v948 = vunpack.c.h.b16 %v222
    %v949 = vunpack.c.l.b16 %v223
    %v950 = vunpack.c.h.b16 %v223
    %v951 = vunpack.c.l.b16 %v224
    %v952 = vunpack.c.h.b16 %v224
    %v953 = vunpack.c.l.b16 %v225
    %v954 = vunpack.c.h.b16 %v225
    %v955 = vunpack.c.l.b16 %v226
    %v956 = vunpack.c.h.b16 %v226
    %v957 = vunpack.c.l.b16 %v227
    %v958 = vunpack.c.h.b16 %v227
    %v959 = vunpack.c.l.b16 %v228
    %v960 = vunpack.c.h.b16 %v228
    %v961 = vunpack.c.l.b16 %v229
    %v962 = vunpack.c.h.b16 %v229
    %v963 = vunpack.c.l.b16 %v230
    %v964 = vunpack.c.h.b16 %v230
    %v965 = vunpack.c.l.b16 %v231
    %v966 = vunpack.c.h.b16 %v231
    %v967 = vunpack.c.l.b16 %v232
    %v968 = vunpack.c.h.b16 %v232
    %v969 = vunpack.c.l.b16 %v233
    %v970 = vunpack.c.h.b16 %v233
    %v971 = vunpack.c.l.b16 %v234
    %v972 = vunpack.c.h.b16 %v234
    %v973 = vunpack.c.l.b16 %v235
    %v974 = vunpack.c.h.b16 %v235
    %v975 = vunpack.c.l.b16 %v236
    %v976 = vunpack.c.h.b16 %v236
    %v977 = vunpack.c.l.b16 %v237
    %v978 = vunpack.c.h.b16 %v237
    %v979 = vunpack.c.l.b16 %v238
    %v980 = vunpack.c.h.b16 %v238
    %v981 = vunpack.c.l.b16 %v239
    %v982 = vunpack.c.h.b16 %v239
    %v983 = vunpack.c.l.b16 %v240
    %v984 = vunpack.c.h.b16 %v240
    %v985 = vunpack.c.l.b16 %v241
    %v986 = vunpack.c.h.b16 %v241
    %v987 = vunpack.c.l.b16 %v242
    %v988 = vunpack.c.h.b16 %v242
    %v989 = vunpack.c.l.b16 %v243
    %v990 = vunpack.c.h.b16 %v243
    %v991 = vunpack.c.l.b16 %v244
    %v992 = vunpack.c.h.b16 %v244
    %v993 = vunpack.c.l.b16 %v245
    %v994 = vunpack.c.h.b16 %v245
    %v995 = vunpack.c.l.b16 %v246
    %v996 = vunpack.c.h.b16 %v246
    %v997 = vunpack.c.l.b16 %v247
    %v998 = vunpack.c.h.b16 %v247
    %v999 = vunpack.c.l.b16 %v248
    %v1000 = vunpack.c.h.b16 %v248
    %v1001 = vunpack.c.l.b16 %v249
    %v1002 = vunpack.c.h.b16 %v249
    %v1003 = vunpack.c.l.b16 %v250
    %v1004 = vunpack.c.h.b16 %v250
    %v1005 = vunpack.c.l.b16 %v251
    %v1006 = vunpack.c.h.b16 %v251
    %v1007 = vunpack.c.l.b16 %v252
    %v1008 = vunpack.c.h.b16 %v252
    %v1009 = vunpack.c.l.b16 %v253
    %v1010 = vunpack.c.h.b16 %v253
    %v1011 = vunpack.c.l.b16 %v254
    %v1012 = vunpack.c.h.b16 %v254
    %v1013 = vunpack.c.l.b16 %v255
    %v1014 = vunpack.c.h.b16 %v255
    %v1015 = vunpack.c.l.b16 %v256
    %v1016 = vunpack.c.h.b16 %v256
    %v1017 = vunpack.c.l.b16 %v257
    %v1018 = vunpack.c.h.b16 %v257
    %v1019 = vunpack.c.l.b16 %v258
    %v1020 = vunpack.c.h.b16 %v258
    %v1021 = vunpack.c.l.b16 %v259
    %v1022 = vunpack.c.h.b16 %v259
    %v1023 = vunpack.c.l.b16 %v260
    %v1024 = vunpack.c.h.b16 %v260
    %v1025 = vunpack.c.l.b16 %v261
    %v1026 = vunpack.c.h.b16 %v261
    %v1027 = vunpack.c.l.b16 %v262
    %v1028 = vunpack.c.h.b16 %v262
    %v1029 = vunpack.c.l.b16 %v263
    %v1030 = vunpack.c.h.b16 %v263
    %v1031 = vunpack.c.l.b16 %v264
    %v1032 = vunpack.c.h.b16 %v264
    %v1033 = vunpack.c.l.b16 %v265
    %v1034 = vunpack.c.h.b16 %v265
    %v1035 = vunpack.c.l.b16 %v266
    %v1036 = vunpack.c.h.b16 %v266
    %v1037 = vunpack.c.l.b16 %v267
    %v1038 = vunpack.c.h.b16 %v267
    %v1039 = vunpack.c.l.b16 %v268
    %v1040 = vunpack.c.h.b16 %v268
    %v1041 = vunpack.c.l.b16 %v269
    %v1042 = vunpack.c.h.b16 %v269
    %v1043 = vunpack.c.l.b16 %v270
    %v1044 = vunpack.c.h.b16 %v270
    %v1045 = vunpack.c.l.b16 %v271
    %v1046 = vunpack.c.h.b16 %v271
    %v1047 = vunpack.c.l.b16 %v272
    %v1048 = vunpack.c.h.b16 %v272
    %v1049 = vunpack.c.l.b16 %v273
    %v1050 = vunpack.c.h.b16 %v273
    %v1051 = vunpack.c.l.b16 %v274
    %v1052 = vunpack.c.h.b16 %v274
    %v1053 = vunpack.c.l.b16 %v275
    %v1054 = vunpack.c.h.b16 %v275
    %v1055 = vunpack.c.l.b16 %v276
    %v1056 = vunpack.c.h.b16 %v276
    %v1057 = vunpack.c.l.b16 %v277
    %v1058 = vunpack.c.h.b16 %v277
    %v1059 = vunpack.c.l.b16 %v278
    %v1060 = vunpack.c.h.b16 %v278
    %v1061 = vunpack.c.l.b16 %v279
    %v1062 = vunpack.c.h.b16 %v279
    %v1063 = vunpack.c.l.b16 %v280
    %v1064 = vunpack.c.h.b16 %v280
    %v1065 = vunpack.c.l.b16 %v281
    %v1066 = vunpack.c.h.b16 %v281
    %v1067 = vunpack.c.l.b16 %v282
    %v1068 = vunpack.c.h.b16 %v282
    %v1069 = vunpack.c.l.b16 %v283
    %v1070 = vunpack.c.h.b16 %v283
    %v1071 = vunpack.c.l.b16 %v284
    %v1072 = vunpack.c.h.b16 %v284
    %v1073 = vunpack.c.l.b16 %v285
    %v1074 = vunpack.c.h.b16 %v285
    %v1075 = vunpack.c.l.b16 %v286
    %v1076 = vunpack.c.h.b16 %v286
    %v1077 = vunpack.c.l.b16 %v287
    %v1078 = vunpack.c.h.b16 %v287
    %v1079 = vunpack.c.l.b16 %v288
    %v1080 = vunpack.c.h.b16 %v288
    %v1081 = vunpack.c.l.b16 %v289
    %v1082 = vunpack.c.h.b16 %v289
    %v1083 = vunpack.c.l.b16 %v290
    %v1084 = vunpack.c.h.b16 %v290
    %v1085 = vunpack.c.l.b16 %v291
    %v1086 = vunpack.c.h.b16 %v291
    %v1087 = vunpack.c.l.b16 %v292
    %v1088 = vunpack.c.h.b16 %v292
    %v1089 = vunpack.c.l.b16 %v293
    %v1090 = vunpack.c.h.b16 %v293
    %v1091 = vunpack.c.l.b16 %v294
    %v1092 = vunpack.c.h.b16 %v294
    %v1093 = vunpack.c.l.b16 %v295
    %v1094 = vunpack.c.h.b16 %v295
    %v1095 = vunpack.c.l.b16 %v296
    %v1096 = vunpack.c.h.b16 %v296
    %v1097 = vunpack.c.l.b16 %v297
    %v1098 = vunpack.c.h.b16 %v297
    %v1099 = vunpack.c.l.b16 %v298
    %v1100 = vunpack.c.h.b16 %v298
    %v1101 = vunpack.c.l.b16 %v299
    %v1102 = vunpack.c.h.b16 %v299
    %v1103 = vunpack.c.l.b16 %v300
    %v1104 = vunpack.c.h.b16 %v300
    %v1105 = vunpack.c.l.b16 %v301
    %v1106 = vunpack.c.h.b16 %v301
    %v1107 = vunpack.c.l.b16 %v302
    %v1108 = vunpack.c.h.b16 %v302
    %v1109 = vunpack.c.l.b16 %v303
    %v1110 = vunpack.c.h.b16 %v303
    %v1111 = vunpack.c.l.b16 %v304
    %v1112 = vunpack.c.h.b16 %v304
    %v1113 = vunpack.c.l.b16 %v305
    %v1114 = vunpack.c.h.b16 %v305
    %v1115 = vunpack.c.l.b16 %v306
    %v1116 = vunpack.c.h.b16 %v306
    %v1117 = vunpack.c.l.b16 %v307
    %v1118 = vunpack.c.h.b16 %v307
    %v1119 = vunpack.c.l.b16 %v308
    %v1120 = vunpack.c.h.b16 %v308
    %v1121 = vunpack.c.l.b16 %v309
    %v1122 = vunpack.c.h.b16 %v309
    %v1123 = vunpack.c.l.b16 %v310
    %v1124 = vunpack.c.h.b16 %v310
    %v1125 = vunpack.c.l.b16 %v311
    %v1126 = vunpack.c.h.b16 %v311
    %v1127 = vunpack.c.l.b16 %v312
    %v1128 = vunpack.c.h.b16 %v312
    %v1129 = vunpack.c.l.b16 %v313
    %v1130 = vunpack.c.h.b16 %v313
    %v1131 = vunpack.c.l.b16 %v314
    %v1132 = vunpack.c.h.b16 %v314
    %v1133 = vpack.c.b16 %v625, %v621
    %v1134 = vpack.c.b16 %v626, %v622
    %v1135 = vpack.c.b16 %v627, %v623
    %v1136 = vpack.c.b16 %v628, %v624
    %v1137 = vpack.c.b16 %v633, %v629
    %v1138 = vpack.c.b16 %v634, %v630
    %v1139 = vpack.c.b16 %v635, %v631
    %v1140 = vpack.c.b16 %v636, %v632
    %v1141 = vpack.c.b16 %v641, %v637
    %v1142 = vpack.c.b16 %v642, %v638
    %v1143 = vpack.c.b16 %v643, %v639
    %v1144 = vpack.c.b16 %v644, %v640
    %v1145 = vpack.c.b16 %v649, %v645
    %v1146 = vpack.c.b16 %v650, %v646
    %v1147 = vpack.c.b16 %v651, %v647
    %v1148 = vpack.c.b16 %v652, %v648
    %v1149 = vpack.c.b16 %v657, %v653
    %v1150 = vpack.c.b16 %v658, %v654
    %v1151 = vpack.c.b16 %v659, %v655
    %v1152 = vpack.c.b16 %v660, %v656
    %v1153 = vpack.c.b16 %v665, %v661
    %v1154 = vpack.c.b16 %v666, %v662
    %v1155 = vpack.c.b16 %v667, %v663
    %v1156 = vpack.c.b16 %v668, %v664
    %v1157 = vpack.c.b16 %v673, %v669
    %v1158 = vpack.c.b16 %v674, %v670
    %v1159 = vpack.c.b16 %v675, %v671
    %v1160 = vpack.c.b16 %v676, %v672
    %v1161 = vpack.c.b16 %v681, %v677
    %v1162 = vpack.c.b16 %v682, %v678
    %v1163 = vpack.c.b16 %v683, %v679
    %v1164 = vpack.c.b16 %v684, %v680
    %v1165 = vpack.c.b16 %v689, %v685
    %v1166 = vpack.c.b16 %v690, %v686
    %v1167 = vpack.c.b16 %v691, %v687
    %v1168 = vpack.c.b16 %v692, %v688
    %v1169 = vpack.c.b16 %v697, %v693
    %v1170 = vpack.c.b16 %v698, %v694
    %v1171 = vpack.c.b16 %v699, %v695
    %v1172 = vpack.c.b16 %v700, %v696
    %v1173 = vpack.c.b16 %v705, %v701
    %v1174 = vpack.c.b16 %v706, %v702
    %v1175 = vpack.c.b16 %v707, %v703
    %v1176 = vpack.c.b16 %v708, %v704
    %v1177 = vpack.c.b16 %v713, %v709
    %v1178 = vpack.c.b16 %v714, %v710
    %v1179 = vpack.c.b16 %v715, %v711
    %v1180 = vpack.c.b16 %v716, %v712
    %v1181 = vpack.c.b16 %v721, %v717
    %v1182 = vpack.c.b16 %v722, %v718
    %v1183 = vpack.c.b16 %v723, %v719
    %v1184 = vpack.c.b16 %v724, %v720
    %v1185 = vpack.c.b16 %v729, %v725
    %v1186 = vpack.c.b16 %v730, %v726
    %v1187 = vpack.c.b16 %v731, %v727
    %v1188 = vpack.c.b16 %v732, %v728
    %v1189 = vpack.c.b16 %v737, %v733
    %v1190 = vpack.c.b16 %v738, %v734
    %v1191 = vpack.c.b16 %v739, %v735
    %v1192 = vpack.c.b16 %v740, %v736
    %v1193 = vpack.c.b16 %v745, %v741
    %v1194 = vpack.c.b16 %v746, %v742
    %v1195 = vpack.c.b16 %v747, %v743
    %v1196 = vpack.c.b16 %v748, %v744
    %v1197 = vpack.c.b16 %v753, %v749
    %v1198 = vpack.c.b16 %v754, %v750
    %v1199 = vpack.c.b16 %v755, %v751
    %v1200 = vpack.c.b16 %v756, %v752
    %v1201 = vpack.c.b16 %v761, %v757
    %v1202 = vpack.c.b16 %v762, %v758
    %v1203 = vpack.c.b16 %v763, %v759
    %v1204 = vpack.c.b16 %v764, %v760
    %v1205 = vpack.c.b16 %v769, %v765
    %v1206 = vpack.c.b16 %v770, %v766
    %v1207 = vpack.c.b16 %v771, %v767
    %v1208 = vpack.c.b16 %v772, %v768
    %v1209 = vpack.c.b16 %v777, %v773
    %v1210 = vpack.c.b16 %v778, %v774
    %v1211 = vpack.c.b16 %v779, %v775
    %v1212 = vpack.c.b16 %v780, %v776
    %v1213 = vpack.c.b16 %v785, %v781
    %v1214 = vpack.c.b16 %v786, %v782
    %v1215 = vpack.c.b16 %v787, %v783
    %v1216 = vpack.c.b16 %v788, %v784
    %v1217 = vpack.c.b16 %v793, %v789
    %v1218 = vpack.c.b16 %v794, %v790
    %v1219 = vpack.c.b16 %v795, %v791
    %v1220 = vpack.c.b16 %v796, %v792
    %v1221 = vpack.c.b16 %v801, %v797
    %v1222 = vpack.c.b16 %v802, %v798
    %v1223 = vpack.c.b16 %v803, %v799
    %v1224 = vpack.c.b16 %v804, %v800
    %v1225 = vpack.c.b16 %v809, %v805
    %v1226 = vpack.c.b16 %v810, %v806
    %v1227 = vpack.c.b16 %v811, %v807
    %v1228 = vpack.c.b16 %v812, %v808
    %v1229 = vpack.c.b16 %v817, %v813
    %v1230 = vpack.c.b16 %v818, %v814
    %v1231 = vpack.c.b16 %v819, %v815
    %v1232 = vpack.c.b16 %v820, %v816
    %v1233 = vpack.c.b16 %v825, %v821
    %v1234 = vpack.c.b16 %v826, %v822
    %v1235 = vpack.c.b16 %v827, %v823
    %v1236 = vpack.c.b16 %v828, %v824
    %v1237 = vpack.c.b16 %v833, %v829
    %v1238 = vpack.c.b16 %v834, %v830
    %v1239 = vpack.c.b16 %v835, %v831
    %v1240 = vpack.c.b16 %v836, %v832
    %v1241 = vpack.c.b16 %v841, %v837
    %v1242 = vpack.c.b16 %v842, %v838
    %v1243 = vpack.c.b16 %v843, %v839
    %v1244 = vpack.c.b16 %v844, %v840
    %v1245 = vpack.c.b16 %v849, %v845
    %v1246 = vpack.c.b16 %v850, %v846
    %v1247 = vpack.c.b16 %v851, %v847
    %v1248 = vpack.c.b16 %v852, %v848
    %v1249 = vpack.c.b16 %v857, %v853
    %v1250 = vpack.c.b16 %v858, %v854
    %v1251 = vpack.c.b16 %v859, %v855
    %v1252 = vpack.c.b16 %v860, %v856
    %v1253 = vpack.c.b16 %v865, %v861
    %v1254 = vpack.c.b16 %v866, %v862
    %v1255 = vpack.c.b16 %v867, %v863
    %v1256 = vpack.c.b16 %v868, %v864
    %v1257 = vpack.c.b16 %v873, %v869
    %v1258 = vpack.c.b16 %v874, %v870
    %v1259 = vpack.c.b16 %v875, %v871
    %v1260 = vpack.c.b16 %v876, %v872
    %v1261 = vpack.c.b16 %v881, %v877
    %v1262 = vpack.c.b16 %v882, %v878
    %v1263 = vpack.c.b16 %v883, %v879
    %v1264 = vpack.c.b16 %v884, %v880
    %v1265 = vpack.c.b16 %v889, %v885
    %v1266 = vpack.c.b16 %v890, %v886
    %v1267 = vpack.c.b16 %v891, %v887
    %v1268 = vpack.c.b16 %v892, %v888
    %v1269 = vpack.c.b16 %v897, %v893
    %v1270 = vpack.c.b16 %v898, %v894
    %v1271 = vpack.c.b16 %v899, %v895
    %v1272 = vpack.c.b16 %v900, %v896
    %v1273 = vpack.c.b16 %v905, %v901
    %v1274 = vpack.c.b16 %v906, %v902
    %v1275 = vpack.c.b16 %v907, %v903
    %v1276 = vpack.c.b16 %v908, %v904
    %v1277 = vpack.c.b16 %v913, %v909
    %v1278 = vpack.c.b16 %v914, %v910
    %v1279 = vpack.c.b16 %v915, %v911
    %v1280 = vpack.c.b16 %v916, %v912
    %v1281 = vpack.c.b16 %v921, %v917
    %v1282 = vpack.c.b16 %v922, %v918
    %v1283 = vpack.c.b16 %v923, %v919
    %v1284 = vpack.c.b16 %v924, %v920
    %v1285 = vpack.c.b16 %v929, %v925
    %v1286 = vpack.c.b16 %v930, %v926
    %v1287 = vpack.c.b16 %v931, %v927
    %v1288 = vpack.c.b16 %v932, %v928
    %v1289 = vpack.c.b16 %v937, %v933
    %v1290 = vpack.c.b16 %v938, %v934
    %v1291 = vpack.c.b16 %v939, %v935
    %v1292 = vpack.c.b16 %v940, %v936
    %v1293 = vpack.c.b16 %v945, %v941
    %v1294 = vpack.c.b16 %v946, %v942
    %v1295 = vpack.c.b16 %v947, %v943
    %v1296 = vpack.c.b16 %v948, %v944
    %v1297 = vpack.c.b16 %v953, %v949
    %v1298 = vpack.c.b16 %v954, %v950
    %v1299 = vpack.c.b16 %v955, %v951
    %v1300 = vpack.c.b16 %v956, %v952
    %v1301 = vpack.c.b16 %v961, %v957
    %v1302 = vpack.c.b16 %v962, %v958
    %v1303 = vpack.c.b16 %v963, %v959
    %v1304 = vpack.c.b16 %v964, %v960
    %v1305 = vpack.c.b16 %v969, %v965
    %v1306 = vpack.c.b16 %v970, %v966
    %v1307 = vpack.c.b16 %v971, %v967
    %v1308 = vpack.c.b16 %v972, %v968
    %v1309 = vpack.c.b16 %v977, %v973
    %v1310 = vpack.c.b16 %v978, %v974
    %v1311 = vpack.c.b16 %v979, %v975
    %v1312 = vpack.c.b16 %v980, %v976
    %v1313 = vpack.c.b16 %v985, %v981
    %v1314 = vpack.c.b16 %v986, %v982
    %v1315 = vpack.c.b16 %v987, %v983
    %v1316 = vpack.c.b16 %v988, %v984
    %v1317 = vpack.c.b16 %v993, %v989
    %v1318 = vpack.c.b16 %v994, %v990
    %v1319 = vpack.c.b16 %v995, %v991
    %v1320 = vpack.c.b16 %v996, %v992
    %v1321 = vpack.c.b16 %v1001, %v997
    %v1322 = vpack.c.b16 %v1002, %v998
    %v1323 = vpack.c.b16 %v1003, %v999
    %v1324 = vpack.c.b16 %v1004, %v1000
    %v1325 = vpack.c.b16 %v1009, %v1005
    %v1326 = vpack.c.b16 %v1010, %v1006
    %v1327 = vpack.c.b16 %v1011, %v1007
    %v1328 = vpack.c.b16 %v1012, %v1008
    %v1329 = vpack.c.b16 %v1017, %v1013
    %v1330 = vpack.c.b16 %v1018, %v1014
    %v1331 = vpack.c.b16 %v1019, %v1015
    %v1332 = vpack.c.b16 %v1020, %v1016
    %v1333 = vpack.c.b16 %v1025, %v1021
    %v1334 = vpack.c.b16 %v1026, %v1022
    %v1335 = vpack.c.b16 %v1027, %v1023
    %v1336 = vpack.c.b16 %v1028, %v1024
    %v1337 = vpack.c.b16 %v1033, %v1029
    %v1338 = vpack.c.b16 %v1034, %v1030
    %v1339 = vpack.c.b16 %v1035, %v1031
    %v1340 = vpack.c.b16 %v1036, %v1032
    %v1341 = vpack.c.b16 %v1041, %v1037
    %v1342 = vpack.c.b16 %v1042, %v1038
    %v1343 = vpack.c.b16 %v1043, %v1039
    %v1344 = vpack.c.b16 %v1044, %v1040
    %v1345 = vpack.c.b16 %v1049, %v1045
    %v1346 = vpack.c.b16 %v1050, %v1046
    %v1347 = vpack.c.b16 %v1051, %v1047
    %v1348 = vpack.c.b16 %v1052, %v1048
    %v1349 = vpack.c.b16 %v1057, %v1053
    %v1350 = vpack.c.b16 %v1058, %v1054
    %v1351 = vpack.c.b16 %v1059, %v1055
    %v1352 = vpack.c.b16 %v1060, %v1056
    %v1353 = vpack.c.b16 %v1065, %v1061
    %v1354 = vpack.c.b16 %v1066, %v1062
    %v1355 = vpack.c.b16 %v1067, %v1063
    %v1356 = vpack.c.b16 %v1068, %v1064
    %v1357 = vpack.c.b16 %v1073, %v1069
    %v1358 = vpack.c.b16 %v1074, %v1070
    %v1359 = vpack.c.b16 %v1075, %v1071
    %v1360 = vpack.c.b16 %v1076, %v1072
    %v1361 = vpack.c.b16 %v1081, %v1077
    %v1362 = vpack.c.b16 %v1082, %v1078
    %v1363 = vpack.c.b16 %v1083, %v1079
    %v1364 = vpack.c.b16 %v1084, %v1080
    %v1365 = vpack.c.b16 %v1089, %v1085
    %v1366 = vpack.c.b16 %v1090, %v1086
    %v1367 = vpack.c.b16 %v1091, %v1087
    %v1368 = vpack.c.b16 %v1092, %v1088
    %v1369 = vpack.c.b16 %v1097, %v1093
    %v1370 = vpack.c.b16 %v1098, %v1094
    %v1371 = vpack.c.b16 %v1099, %v1095
    %v1372 = vpack.c.b16 %v1100, %v1096
    %v1373 = vpack.c.b16 %v1105, %v1101
    %v1374 = vpack.c.b16 %v1106, %v1102
    %v1375 = vpack.c.b16 %v1107, %v1103
    %v1376 = vpack.c.b16 %v1108, %v1104
    %v1377 = vpack.c.b16 %v1113, %v1109
    %v1378 = vpack.c.b16 %v1114, %v1110
    %v1379 = vpack.c.b16 %v1115, %v1111
    %v1380 = vpack.c.b16 %v1116, %v1112
    %v1381 = vpack.c.b16 %v1121, %v1117
    %v1382 = vpack.c.b16 %v1122, %v1118
    %v1383 = vpack.c.b16 %v1123, %v1119
    %v1384 = vpack.c.b16 %v1124, %v1120
    %v1385 = vpack.c.b16 %v1129, %v1125
    %v1386 = vpack.c.b16 %v1130, %v1126
    %v1387 = vpack.c.b16 %v1131, %v1127
    %v1388 = vpack.c.b16 %v1132, %v1128
    %1645 = vmatprep.subr.bf16.mxu0 %v1134
    %1646 = vmatpush1.bf16.msra.mxu0 %v1133
    %1647 = vmatprep.subr.bf16.mxu0 %v1138
    %1648 = vmatpush1.bf16.msra.mxu0 %v1137
    %1649 = vmatprep.subr.bf16.mxu0 %v1142
    %1650 = vmatpush1.bf16.msra.mxu0 %v1141
    %1651 = vmatprep.subr.bf16.mxu0 %v1146
    %1652 = vmatpush1.bf16.msra.mxu0 %v1145
    %1653 = vmatprep.subr.bf16.mxu0 %v1150
    %1654 = vmatpush1.bf16.msra.mxu0 %v1149
    %1655 = vmatprep.subr.bf16.mxu0 %v1154
    %1656 = vmatpush1.bf16.msra.mxu0 %v1153
    %1657 = vmatprep.subr.bf16.mxu0 %v1158
    %1658 = vmatpush1.bf16.msra.mxu0 %v1157
    %1659 = vmatprep.subr.bf16.mxu0 %v1162
    %1660 = vmatpush1.bf16.msra.mxu0 %v1161
    %1661 = vmatprep.subr.bf16.mxu0 %v1166
    %1662 = vmatpush1.bf16.msra.mxu0 %v1165
    %1663 = vmatprep.subr.bf16.mxu0 %v1170
    %1664 = vmatpush1.bf16.msra.mxu0 %v1169
    %1665 = vmatprep.subr.bf16.mxu0 %v1174
    %1666 = vmatpush1.bf16.msra.mxu0 %v1173
    %1667 = vmatprep.subr.bf16.mxu0 %v1178
    %1668 = vmatpush1.bf16.msra.mxu0 %v1177
    %1669 = vmatprep.subr.bf16.mxu0 %v1182
    %1670 = vmatpush1.bf16.msra.mxu0 %v1181
    %1671 = vmatprep.subr.bf16.mxu0 %v1186
    %1672 = vmatpush1.bf16.msra.mxu0 %v1185
    %1673 = vmatprep.subr.bf16.mxu0 %v1190
    %1674 = vmatpush1.bf16.msra.mxu0 %v1189
    %1675 = vmatprep.subr.bf16.mxu0 %v1194
    %1676 = vmatpush1.bf16.msra.mxu0 %v1193
    %1677 = vmatprep.mubr.bf16.mxu0 %v350
    %1678 = vmatmul.mubr.bf16.gmra.mrb[0].mxu0 %v349
    %v1679 = vpop.f32.mrb[0].mxu0
    %v1680 = vadd.f32 %v320, %v1679
    %v1681 = vpop.f32.mrb[0].mxu0
    %v1682 = vadd.f32 %v324, %v1681
    %v1683 = vpop.f32.mrb[0].mxu0
    %v1684 = vpop.f32.mrb[0].mxu0
    %1685 = vdwg.mxu0
    %1686 = vmatprep.subr.bf16.mxu0 %v1198
    %1687 = vmatpush1.bf16.msra.mxu0 %v1197
    %1688 = vmatprep.subr.bf16.mxu0 %v1202
    %1689 = vmatpush1.bf16.msra.mxu0 %v1201
    %1690 = vmatprep.subr.bf16.mxu0 %v1206
    %1691 = vmatpush1.bf16.msra.mxu0 %v1205
    %1692 = vmatprep.subr.bf16.mxu0 %v1210
    %1693 = vmatpush1.bf16.msra.mxu0 %v1209
    %1694 = vmatprep.subr.bf16.mxu0 %v1214
    %1695 = vmatpush1.bf16.msra.mxu0 %v1213
    %1696 = vmatprep.subr.bf16.mxu0 %v1218
    %1697 = vmatpush1.bf16.msra.mxu0 %v1217
    %1698 = vmatprep.subr.bf16.mxu0 %v1222
    %1699 = vmatpush1.bf16.msra.mxu0 %v1221
    %1700 = vmatprep.subr.bf16.mxu0 %v1226
    %1701 = vmatpush1.bf16.msra.mxu0 %v1225
    %1702 = vmatprep.subr.bf16.mxu0 %v1230
    %1703 = vmatpush1.bf16.msra.mxu0 %v1229
    %1704 = vmatprep.subr.bf16.mxu0 %v1234
    %1705 = vmatpush1.bf16.msra.mxu0 %v1233
    %1706 = vmatprep.subr.bf16.mxu0 %v1238
    %1707 = vmatpush1.bf16.msra.mxu0 %v1237
    %1708 = vmatprep.subr.bf16.mxu0 %v1242
    %1709 = vmatpush1.bf16.msra.mxu0 %v1241
    %1710 = vmatprep.subr.bf16.mxu0 %v1246
    %1711 = vmatpush1.bf16.msra.mxu0 %v1245
    %1712 = vmatprep.subr.bf16.mxu0 %v1250
    %1713 = vmatpush1.bf16.msra.mxu0 %v1249
    %1714 = vmatprep.subr.bf16.mxu0 %v1254
    %1715 = vmatpush1.bf16.msra.mxu0 %v1253
    %1716 = vmatprep.subr.bf16.mxu0 %v1258
    %1717 = vmatpush1.bf16.msra.mxu0 %v1257
    %1718 = vmatprep.mubr.bf16.mxu0 %v352
    %1719 = vmatmul.mubr.bf16.gmra.mrb[0].mxu0 %v351
    %v1720 = vpop.f32.mrb[0].mxu0
    %v1721 = vadd.f32 %v1680, %v1720
    %v1722 = vpop.f32.mrb[0].mxu0
    %v1723 = vadd.f32 %v1682, %v1722
    %v1724 = vpop.f32.mrb[0].mxu0
    %v1725 = vpop.f32.mrb[0].mxu0
    %1726 = vdwg.mxu0
    %1727 = vmatprep.subr.bf16.mxu0 %v1262
    %1728 = vmatpush1.bf16.msra.mxu0 %v1261
    %1729 = vmatprep.subr.bf16.mxu0 %v1266
    %1730 = vmatpush1.bf16.msra.mxu0 %v1265
    %1731 = vmatprep.subr.bf16.mxu0 %v1270
    %1732 = vmatpush1.bf16.msra.mxu0 %v1269
    %1733 = vmatprep.subr.bf16.mxu0 %v1274
    %1734 = vmatpush1.bf16.msra.mxu0 %v1273
    %1735 = vmatprep.subr.bf16.mxu0 %v1278
    %1736 = vmatpush1.bf16.msra.mxu0 %v1277
    %1737 = vmatprep.subr.bf16.mxu0 %v1282
    %1738 = vmatpush1.bf16.msra.mxu0 %v1281
    %1739 = vmatprep.subr.bf16.mxu0 %v1286
    %1740 = vmatpush1.bf16.msra.mxu0 %v1285
    %1741 = vmatprep.subr.bf16.mxu0 %v1290
    %1742 = vmatpush1.bf16.msra.mxu0 %v1289
    %1743 = vmatprep.subr.bf16.mxu0 %v1294
    %1744 = vmatpush1.bf16.msra.mxu0 %v1293
    %1745 = vmatprep.subr.bf16.mxu0 %v1298
    %1746 = vmatpush1.bf16.msra.mxu0 %v1297
    %1747 = vmatprep.subr.bf16.mxu0 %v1302
    %1748 = vmatpush1.bf16.msra.mxu0 %v1301
    %1749 = vmatprep.subr.bf16.mxu0 %v1306
    %1750 = vmatpush1.bf16.msra.mxu0 %v1305
    %1751 = vmatprep.subr.bf16.mxu0 %v1310
    %1752 = vmatpush1.bf16.msra.mxu0 %v1309
    %1753 = vmatprep.subr.bf16.mxu0 %v1314
    %1754 = vmatpush1.bf16.msra.mxu0 %v1313
    %1755 = vmatprep.subr.bf16.mxu0 %v1318
    %1756 = vmatpush1.bf16.msra.mxu0 %v1317
    %1757 = vmatprep.subr.bf16.mxu0 %v1322
    %1758 = vmatpush1.bf16.msra.mxu0 %v1321
    %1759 = vmatprep.mubr.bf16.mxu0 %v354
    %1760 = vmatmul.mubr.bf16.gmra.mrb[0].mxu0 %v353
    %v1761 = vpop.f32.mrb[0].mxu0
    %v1762 = vadd.f32 %v1721, %v1761
    %v1763 = vpop.f32.mrb[0].mxu0
    %v1764 = vadd.f32 %v1723, %v1763
    %v1765 = vpop.f32.mrb[0].mxu0
    %v1766 = vpop.f32.mrb[0].mxu0
    %1767 = vdwg.mxu0
    %1768 = vmatprep.subr.bf16.mxu0 %v1326
    %1769 = vmatpush1.bf16.msra.mxu0 %v1325
    %1770 = vmatprep.subr.bf16.mxu0 %v1330
    %1771 = vmatpush1.bf16.msra.mxu0 %v1329
    %1772 = vmatprep.subr.bf16.mxu0 %v1334
    %1773 = vmatpush1.bf16.msra.mxu0 %v1333
    %1774 = vmatprep.subr.bf16.mxu0 %v1338
    %1775 = vmatpush1.bf16.msra.mxu0 %v1337
    %1776 = vmatprep.subr.bf16.mxu0 %v1342
    %1777 = vmatpush1.bf16.msra.mxu0 %v1341
    %1778 = vmatprep.subr.bf16.mxu0 %v1346
    %1779 = vmatpush1.bf16.msra.mxu0 %v1345
    %1780 = vmatprep.subr.bf16.mxu0 %v1350
    %1781 = vmatpush1.bf16.msra.mxu0 %v1349
    %1782 = vmatprep.subr.bf16.mxu0 %v1354
    %1783 = vmatpush1.bf16.msra.mxu0 %v1353
    %1784 = vmatprep.subr.bf16.mxu0 %v1358
    %1785 = vmatpush1.bf16.msra.mxu0 %v1357
    %1786 = vmatprep.subr.bf16.mxu0 %v1362
    %1787 = vmatpush1.bf16.msra.mxu0 %v1361
    %1788 = vmatprep.subr.bf16.mxu0 %v1366
    %1789 = vmatpush1.bf16.msra.mxu0 %v1365
    %1790 = vmatprep.subr.bf16.mxu0 %v1370
    %1791 = vmatpush1.bf16.msra.mxu0 %v1369
    %1792 = vmatprep.subr.bf16.mxu0 %v1374
    %1793 = vmatpush1.bf16.msra.mxu0 %v1373
    %1794 = vmatprep.subr.bf16.mxu0 %v1378
    %1795 = vmatpush1.bf16.msra.mxu0 %v1377
    %1796 = vmatprep.subr.bf16.mxu0 %v1382
    %1797 = vmatpush1.bf16.msra.mxu0 %v1381
    %1798 = vmatprep.subr.bf16.mxu0 %v1386
    %1799 = vmatpush1.bf16.msra.mxu0 %v1385
    %1800 = vmatprep.mubr.bf16.mxu0 %v356
    %1801 = vmatmul.mubr.bf16.gmra.mrb[0].mxu0 %v355
    %v1802 = vpop.f32.mrb[0].mxu0
    %v1803 = vadd.f32 %v1762, %v1802
    %v1804 = vpop.f32.mrb[0].mxu0
    %v1805 = vadd.f32 %v1764, %v1804
    %v1806 = vpop.f32.mrb[0].mxu0
    %v1807 = vpop.f32.mrb[0].mxu0
    %1808 = vdwg.mxu0
    %1809 = vmatprep.subr.bf16.mxu0 %v1136
    %1810 = vmatpush1.bf16.msra.mxu0 %v1135
    %1811 = vmatprep.subr.bf16.mxu0 %v1140
    %1812 = vmatpush1.bf16.msra.mxu0 %v1139
    %1813 = vmatprep.subr.bf16.mxu0 %v1144
    %1814 = vmatpush1.bf16.msra.mxu0 %v1143
    %1815 = vmatprep.subr.bf16.mxu0 %v1148
    %1816 = vmatpush1.bf16.msra.mxu0 %v1147
    %1817 = vmatprep.subr.bf16.mxu0 %v1152
    %1818 = vmatpush1.bf16.msra.mxu0 %v1151
    %1819 = vmatprep.subr.bf16.mxu0 %v1156
    %1820 = vmatpush1.bf16.msra.mxu0 %v1155
    %1821 = vmatprep.subr.bf16.mxu0 %v1160
    %1822 = vmatpush1.bf16.msra.mxu0 %v1159
    %1823 = vmatprep.subr.bf16.mxu0 %v1164
    %1824 = vmatpush1.bf16.msra.mxu0 %v1163
    %1825 = vmatprep.subr.bf16.mxu0 %v1168
    %1826 = vmatpush1.bf16.msra.mxu0 %v1167
    %1827 = vmatprep.subr.bf16.mxu0 %v1172
    %1828 = vmatpush1.bf16.msra.mxu0 %v1171
    %1829 = vmatprep.subr.bf16.mxu0 %v1176
    %1830 = vmatpush1.bf16.msra.mxu0 %v1175
    %1831 = vmatprep.subr.bf16.mxu0 %v1180
    %1832 = vmatpush1.bf16.msra.mxu0 %v1179
    %1833 = vmatprep.subr.bf16.mxu0 %v1184
    %1834 = vmatpush1.bf16.msra.mxu0 %v1183
    %1835 = vmatprep.subr.bf16.mxu0 %v1188
    %1836 = vmatpush1.bf16.msra.mxu0 %v1187
    %1837 = vmatprep.subr.bf16.mxu0 %v1192
    %1838 = vmatpush1.bf16.msra.mxu0 %v1191
    %1839 = vmatprep.subr.bf16.mxu0 %v1196
    %1840 = vmatpush1.bf16.msra.mxu0 %v1195
    %1841 = vmatprep.mubr.bf16.mxu0 %v350
    %1842 = vmatmul.mubr.bf16.gmra.mrb[0].mxu0 %v349
    %v1843 = vpop.f32.mrb[0].mxu0
    %v1844 = vadd.f32 %v328, %v1843
    %v1845 = vpop.f32.mrb[0].mxu0
    %v1846 = vadd.f32 %v332, %v1845
    %v1847 = vpop.f32.mrb[0].mxu0
    %v1848 = vpop.f32.mrb[0].mxu0
    %1849 = vdwg.mxu0
    %1850 = vmatprep.subr.bf16.mxu0 %v1200
    %1851 = vmatpush1.bf16.msra.mxu0 %v1199
    %1852 = vmatprep.subr.bf16.mxu0 %v1204
    %1853 = vmatpush1.bf16.msra.mxu0 %v1203
    %1854 = vmatprep.subr.bf16.mxu0 %v1208
    %1855 = vmatpush1.bf16.msra.mxu0 %v1207
    %1856 = vmatprep.subr.bf16.mxu0 %v1212
    %1857 = vmatpush1.bf16.msra.mxu0 %v1211
    %1858 = vmatprep.subr.bf16.mxu0 %v1216
    %1859 = vmatpush1.bf16.msra.mxu0 %v1215
    %1860 = vmatprep.subr.bf16.mxu0 %v1220
    %1861 = vmatpush1.bf16.msra.mxu0 %v1219
    %1862 = vmatprep.subr.bf16.mxu0 %v1224
    %1863 = vmatpush1.bf16.msra.mxu0 %v1223
    %1864 = vmatprep.subr.bf16.mxu0 %v1228
    %1865 = vmatpush1.bf16.msra.mxu0 %v1227
    %1866 = vmatprep.subr.bf16.mxu0 %v1232
    %1867 = vmatpush1.bf16.msra.mxu0 %v1231
    %1868 = vmatprep.subr.bf16.mxu0 %v1236
    %1869 = vmatpush1.bf16.msra.mxu0 %v1235
    %1870 = vmatprep.subr.bf16.mxu0 %v1240
    %1871 = vmatpush1.bf16.msra.mxu0 %v1239
    %1872 = vmatprep.subr.bf16.mxu0 %v1244
    %1873 = vmatpush1.bf16.msra.mxu0 %v1243
    %1874 = vmatprep.subr.bf16.mxu0 %v1248
    %1875 = vmatpush1.bf16.msra.mxu0 %v1247
    %1876 = vmatprep.subr.bf16.mxu0 %v1252
    %1877 = vmatpush1.bf16.msra.mxu0 %v1251
    %1878 = vmatprep.subr.bf16.mxu0 %v1256
    %1879 = vmatpush1.bf16.msra.mxu0 %v1255
    %1880 = vmatprep.subr.bf16.mxu0 %v1260
    %1881 = vmatpush1.bf16.msra.mxu0 %v1259
    %1882 = vmatprep.mubr.bf16.mxu0 %v352
    %1883 = vmatmul.mubr.bf16.gmra.mrb[0].mxu0 %v351
    %v1884 = vpop.f32.mrb[0].mxu0
    %v1885 = vadd.f32 %v1844, %v1884
    %v1886 = vpop.f32.mrb[0].mxu0
    %v1887 = vadd.f32 %v1846, %v1886
    %v1888 = vpop.f32.mrb[0].mxu0
    %v1889 = vpop.f32.mrb[0].mxu0
    %1890 = vdwg.mxu0
    %1891 = vmatprep.subr.bf16.mxu0 %v1264
    %1892 = vmatpush1.bf16.msra.mxu0 %v1263
    %1893 = vmatprep.subr.bf16.mxu0 %v1268
    %1894 = vmatpush1.bf16.msra.mxu0 %v1267
    %1895 = vmatprep.subr.bf16.mxu0 %v1272
    %1896 = vmatpush1.bf16.msra.mxu0 %v1271
    %1897 = vmatprep.subr.bf16.mxu0 %v1276
    %1898 = vmatpush1.bf16.msra.mxu0 %v1275
    %1899 = vmatprep.subr.bf16.mxu0 %v1280
    %1900 = vmatpush1.bf16.msra.mxu0 %v1279
    %1901 = vmatprep.subr.bf16.mxu0 %v1284
    %1902 = vmatpush1.bf16.msra.mxu0 %v1283
    %1903 = vmatprep.subr.bf16.mxu0 %v1288
    %1904 = vmatpush1.bf16.msra.mxu0 %v1287
    %1905 = vmatprep.subr.bf16.mxu0 %v1292
    %1906 = vmatpush1.bf16.msra.mxu0 %v1291
    %1907 = vmatprep.subr.bf16.mxu0 %v1296
    %1908 = vmatpush1.bf16.msra.mxu0 %v1295
    %1909 = vmatprep.subr.bf16.mxu0 %v1300
    %1910 = vmatpush1.bf16.msra.mxu0 %v1299
    %1911 = vmatprep.subr.bf16.mxu0 %v1304
    %1912 = vmatpush1.bf16.msra.mxu0 %v1303
    %1913 = vmatprep.subr.bf16.mxu0 %v1308
    %1914 = vmatpush1.bf16.msra.mxu0 %v1307
    %1915 = vmatprep.subr.bf16.mxu0 %v1312
    %1916 = vmatpush1.bf16.msra.mxu0 %v1311
    %1917 = vmatprep.subr.bf16.mxu0 %v1316
    %1918 = vmatpush1.bf16.msra.mxu0 %v1315
    %1919 = vmatprep.subr.bf16.mxu0 %v1320
    %1920 = vmatpush1.bf16.msra.mxu0 %v1319
    %1921 = vmatprep.subr.bf16.mxu0 %v1324
    %1922 = vmatpush1.bf16.msra.mxu0 %v1323
    %1923 = vmatprep.mubr.bf16.mxu0 %v354
    %1924 = vmatmul.mubr.bf16.gmra.mrb[0].mxu0 %v353
    %v1925 = vpop.f32.mrb[0].mxu0
    %v1926 = vadd.f32 %v1885, %v1925
    %v1927 = vpop.f32.mrb[0].mxu0
    %v1928 = vadd.f32 %v1887, %v1927
    %v1929 = vpop.f32.mrb[0].mxu0
    %v1930 = vpop.f32.mrb[0].mxu0
    %1931 = vdwg.mxu0
    %1932 = vmatprep.subr.bf16.mxu0 %v1328
    %1933 = vmatpush1.bf16.msra.mxu0 %v1327
    %1934 = vmatprep.subr.bf16.mxu0 %v1332
    %1935 = vmatpush1.bf16.msra.mxu0 %v1331
    %1936 = vmatprep.subr.bf16.mxu0 %v1336
    %1937 = vmatpush1.bf16.msra.mxu0 %v1335
    %1938 = vmatprep.subr.bf16.mxu0 %v1340
    %1939 = vmatpush1.bf16.msra.mxu0 %v1339
    %1940 = vmatprep.subr.bf16.mxu0 %v1344
    %1941 = vmatpush1.bf16.msra.mxu0 %v1343
    %1942 = vmatprep.subr.bf16.mxu0 %v1348
    %1943 = vmatpush1.bf16.msra.mxu0 %v1347
    %1944 = vmatprep.subr.bf16.mxu0 %v1352
    %1945 = vmatpush1.bf16.msra.mxu0 %v1351
    %1946 = vmatprep.subr.bf16.mxu0 %v1356
    %1947 = vmatpush1.bf16.msra.mxu0 %v1355
    %1948 = vmatprep.subr.bf16.mxu0 %v1360
    %1949 = vmatpush1.bf16.msra.mxu0 %v1359
    %1950 = vmatprep.subr.bf16.mxu0 %v1364
    %1951 = vmatpush1.bf16.msra.mxu0 %v1363
    %1952 = vmatprep.subr.bf16.mxu0 %v1368
    %1953 = vmatpush1.bf16.msra.mxu0 %v1367
    %1954 = vmatprep.subr.bf16.mxu0 %v1372
    %1955 = vmatpush1.bf16.msra.mxu0 %v1371
    %1956 = vmatprep.subr.bf16.mxu0 %v1376
    %1957 = vmatpush1.bf16.msra.mxu0 %v1375
    %1958 = vmatprep.subr.bf16.mxu0 %v1380
    %1959 = vmatpush1.bf16.msra.mxu0 %v1379
    %1960 = vmatprep.subr.bf16.mxu0 %v1384
    %1961 = vmatpush1.bf16.msra.mxu0 %v1383
    %1962 = vmatprep.subr.bf16.mxu0 %v1388
    %1963 = vmatpush1.bf16.msra.mxu0 %v1387
    %1964 = vmatprep.mubr.bf16.mxu0 %v356
    %1965 = vmatmul.mubr.bf16.gmra.mrb[0].mxu0 %v355
    %v1966 = vpop.f32.mrb[0].mxu0
    %v1967 = vadd.f32 %v1926, %v1966
    %v1968 = vpop.f32.mrb[0].mxu0
    %v1969 = vadd.f32 %v1928, %v1968
    %v1970 = vpop.f32.mrb[0].mxu0
    %v1971 = vpop.f32.mrb[0].mxu0
    %1972 = vdwg.mxu0
    %v1973 = vmax.f32 %v1803, 0.0
    %v1974 = vmax.f32 %v1805, 0.0
    %v1975 = vmax.f32 %v1967, 0.0
    %v1976 = vmax.f32 %v1969, 0.0
    %v1977 = vpack.c.bf16 %v1973, %v1973
    %v1978 = vpack.c.bf16 %v1974, %v1974
    %v1979 = vpack.c.bf16 %v1975, %v1975
    %v1980 = vpack.c.bf16 %v1976, %v1976
    %v1981 = vld [vmem:[#allocation4] sm:$0xff]
    %v1982 = vld [vmem:[#allocation4 + $0x8] sm:$0xff]
    %v1983 = vld [vmem:[#allocation4 + $0x10] sm:$0xff]
    %v1984 = vld [vmem:[#allocation4 + $0x18] sm:$0xff]
    %v1985 = vld [vmem:[#allocation4 + $0x20] sm:$0xff]
    %v1986 = vld [vmem:[#allocation4 + $0x28] sm:$0xff]
    %v1987 = vld [vmem:[#allocation4 + $0x30] sm:$0xff]
    %v1988 = vld [vmem:[#allocation4 + $0x38] sm:$0xff]
    %v1989 = vld [vmem:[#allocation4 + $0x40] sm:$0xff]
    %v1990 = vld [vmem:[#allocation4 + $0x48] sm:$0xff]
    %v1991 = vld [vmem:[#allocation4 + $0x50] sm:$0xff]
    %v1992 = vld [vmem:[#allocation4 + $0x58] sm:$0xff]
    %v1993 = vld [vmem:[#allocation4 + $0x60] sm:$0xff]
    %v1994 = vld [vmem:[#allocation4 + $0x68] sm:$0xff]
    %v1995 = vld [vmem:[#allocation4 + $0x70] sm:$0xff]
    %v1996 = vld [vmem:[#allocation4 + $0x78] sm:$0xff]
    %v1997 = vld [vmem:[#allocation4 + $0x80] sm:$0xff]
    %v1998 = vld [vmem:[#allocation4 + $0x88] sm:$0xff]
    %v1999 = vld [vmem:[#allocation4 + $0x90] sm:$0xff]
    %v2000 = vld [vmem:[#allocation4 + $0x98] sm:$0xff]
    %v2001 = vld [vmem:[#allocation4 + $0xa0] sm:$0xff]
    %v2002 = vld [vmem:[#allocation4 + $0xa8] sm:$0xff]
    %v2003 = vld [vmem:[#allocation4 + $0xb0] sm:$0xff]
    %v2004 = vld [vmem:[#allocation4 + $0xb8] sm:$0xff]
    %v2005 = vld [vmem:[#allocation4 + $0xc0] sm:$0xff]
    %v2006 = vld [vmem:[#allocation4 + $0xc8] sm:$0xff]
    %v2007 = vld [vmem:[#allocation4 + $0xd0] sm:$0xff]
    %v2008 = vld [vmem:[#allocation4 + $0xd8] sm:$0xff]
    %v2009 = vld [vmem:[#allocation4 + $0xe0] sm:$0xff]
    %v2010 = vld [vmem:[#allocation4 + $0xe8] sm:$0xff]
    %v2011 = vld [vmem:[#allocation4 + $0xf0] sm:$0xff]
    %v2012 = vld [vmem:[#allocation4 + $0xf8] sm:$0xff]
    %v2013 = vld [vmem:[#allocation4 + $0x100] sm:$0xff]
    %v2014 = vld [vmem:[#allocation4 + $0x108] sm:$0xff]
    %v2015 = vld [vmem:[#allocation4 + $0x110] sm:$0xff]
    %v2016 = vld [vmem:[#allocation4 + $0x118] sm:$0xff]
    %v2017 = vld [vmem:[#allocation4 + $0x120] sm:$0xff]
    %v2018 = vld [vmem:[#allocation4 + $0x128] sm:$0xff]
    %v2019 = vld [vmem:[#allocation4 + $0x130] sm:$0xff]
    %v2020 = vld [vmem:[#allocation4 + $0x138] sm:$0xff]
    %v2021 = vld [vmem:[#allocation4 + $0x140] sm:$0xff]
    %v2022 = vld [vmem:[#allocation4 + $0x148] sm:$0xff]
    %v2023 = vld [vmem:[#allocation4 + $0x150] sm:$0xff]
    %v2024 = vld [vmem:[#allocation4 + $0x158] sm:$0xff]
    %v2025 = vld [vmem:[#allocation4 + $0x160] sm:$0xff]
    %v2026 = vld [vmem:[#allocation4 + $0x168] sm:$0xff]
    %v2027 = vld [vmem:[#allocation4 + $0x170] sm:$0xff]
    %v2028 = vld [vmem:[#allocation4 + $0x178] sm:$0xff]
    %v2029 = vld [vmem:[#allocation4 + $0x180] sm:$0xff]
    %v2030 = vld [vmem:[#allocation4 + $0x188] sm:$0xff]
    %v2031 = vld [vmem:[#allocation4 + $0x190] sm:$0xff]
    %v2032 = vld [vmem:[#allocation4 + $0x198] sm:$0xff]
    %v2033 = vld [vmem:[#allocation4 + $0x1a0] sm:$0xff]
    %v2034 = vld [vmem:[#allocation4 + $0x1a8] sm:$0xff]
    %v2035 = vld [vmem:[#allocation4 + $0x1b0] sm:$0xff]
    %v2036 = vld [vmem:[#allocation4 + $0x1b8] sm:$0xff]
    %v2037 = vld [vmem:[#allocation4 + $0x1c0] sm:$0xff]
    %v2038 = vld [vmem:[#allocation4 + $0x1c8] sm:$0xff]
    %v2039 = vld [vmem:[#allocation4 + $0x1d0] sm:$0xff]
    %v2040 = vld [vmem:[#allocation4 + $0x1d8] sm:$0xff]
    %v2041 = vld [vmem:[#allocation4 + $0x1e0] sm:$0xff]
    %v2042 = vld [vmem:[#allocation4 + $0x1e8] sm:$0xff]
    %v2043 = vld [vmem:[#allocation4 + $0x1f0] sm:$0xff]
    %v2044 = vld [vmem:[#allocation4 + $0x1f8] sm:$0xff]
    %v2045 = vld [vmem:[%s4] sm:$0x3]
    %v2047 = vlaneseq
    %v2048 = vshrl.u32 %v2047, 7
    %v2049 = vsub.s32 0, %v2048
    %v2050 = vrot.slane %v2045, %v2049
    %v2051 = vlaneseq
    %v2052 = vshrl.u32 %v2051, 7
    %v2053 = vsub.s32 1, %v2052
    %v2054 = vrot.slane %v2045, %v2053
    %v2121 = vunpack.c.l.b16 %v1981
    %v2122 = vunpack.c.h.b16 %v1981
    %v2123 = vunpack.c.l.b16 %v1982
    %v2124 = vunpack.c.h.b16 %v1982
    %v2125 = vunpack.c.l.b16 %v1983
    %v2126 = vunpack.c.h.b16 %v1983
    %v2127 = vunpack.c.l.b16 %v1984
    %v2128 = vunpack.c.h.b16 %v1984
    %v2129 = vunpack.c.l.b16 %v1985
    %v2130 = vunpack.c.h.b16 %v1985
    %v2131 = vunpack.c.l.b16 %v1986
    %v2132 = vunpack.c.h.b16 %v1986
    %v2133 = vunpack.c.l.b16 %v1987
    %v2134 = vunpack.c.h.b16 %v1987
    %v2135 = vunpack.c.l.b16 %v1988
    %v2136 = vunpack.c.h.b16 %v1988
    %v2137 = vunpack.c.l.b16 %v1989
    %v2138 = vunpack.c.h.b16 %v1989
    %v2139 = vunpack.c.l.b16 %v1990
    %v2140 = vunpack.c.h.b16 %v1990
    %v2141 = vunpack.c.l.b16 %v1991
    %v2142 = vunpack.c.h.b16 %v1991
    %v2143 = vunpack.c.l.b16 %v1992
    %v2144 = vunpack.c.h.b16 %v1992
    %v2145 = vunpack.c.l.b16 %v1993
    %v2146 = vunpack.c.h.b16 %v1993
    %v2147 = vunpack.c.l.b16 %v1994
    %v2148 = vunpack.c.h.b16 %v1994
    %v2149 = vunpack.c.l.b16 %v1995
    %v2150 = vunpack.c.h.b16 %v1995
    %v2151 = vunpack.c.l.b16 %v1996
    %v2152 = vunpack.c.h.b16 %v1996
    %v2153 = vunpack.c.l.b16 %v1997
    %v2154 = vunpack.c.h.b16 %v1997
    %v2155 = vunpack.c.l.b16 %v1998
    %v2156 = vunpack.c.h.b16 %v1998
    %v2157 = vunpack.c.l.b16 %v1999
    %v2158 = vunpack.c.h.b16 %v1999
    %v2159 = vunpack.c.l.b16 %v2000
    %v2160 = vunpack.c.h.b16 %v2000
    %v2161 = vunpack.c.l.b16 %v2001
    %v2162 = vunpack.c.h.b16 %v2001
    %v2163 = vunpack.c.l.b16 %v2002
    %v2164 = vunpack.c.h.b16 %v2002
    %v2165 = vunpack.c.l.b16 %v2003
    %v2166 = vunpack.c.h.b16 %v2003
    %v2167 = vunpack.c.l.b16 %v2004
    %v2168 = vunpack.c.h.b16 %v2004
    %v2169 = vunpack.c.l.b16 %v2005
    %v2170 = vunpack.c.h.b16 %v2005
    %v2171 = vunpack.c.l.b16 %v2006
    %v2172 = vunpack.c.h.b16 %v2006
    %v2173 = vunpack.c.l.b16 %v2007
    %v2174 = vunpack.c.h.b16 %v2007
    %v2175 = vunpack.c.l.b16 %v2008
    %v2176 = vunpack.c.h.b16 %v2008
    %v2177 = vunpack.c.l.b16 %v2009
    %v2178 = vunpack.c.h.b16 %v2009
    %v2179 = vunpack.c.l.b16 %v2010
    %v2180 = vunpack.c.h.b16 %v2010
    %v2181 = vunpack.c.l.b16 %v2011
    %v2182 = vunpack.c.h.b16 %v2011
    %v2183 = vunpack.c.l.b16 %v2012
    %v2184 = vunpack.c.h.b16 %v2012
    %v2185 = vunpack.c.l.b16 %v2013
    %v2186 = vunpack.c.h.b16 %v2013
    %v2187 = vunpack.c.l.b16 %v2014
    %v2188 = vunpack.c.h.b16 %v2014
    %v2189 = vunpack.c.l.b16 %v2015
    %v2190 = vunpack.c.h.b16 %v2015
    %v2191 = vunpack.c.l.b16 %v2016
    %v2192 = vunpack.c.h.b16 %v2016
    %v2193 = vunpack.c.l.b16 %v2017
    %v2194 = vunpack.c.h.b16 %v2017
    %v2195 = vunpack.c.l.b16 %v2018
    %v2196 = vunpack.c.h.b16 %v2018
    %v2197 = vunpack.c.l.b16 %v2019
    %v2198 = vunpack.c.h.b16 %v2019
    %v2199 = vunpack.c.l.b16 %v2020
    %v2200 = vunpack.c.h.b16 %v2020
    %v2201 = vunpack.c.l.b16 %v2021
    %v2202 = vunpack.c.h.b16 %v2021
    %v2203 = vunpack.c.l.b16 %v2022
    %v2204 = vunpack.c.h.b16 %v2022
    %v2205 = vunpack.c.l.b16 %v2023
    %v2206 = vunpack.c.h.b16 %v2023
    %v2207 = vunpack.c.l.b16 %v2024
    %v2208 = vunpack.c.h.b16 %v2024
    %v2209 = vunpack.c.l.b16 %v2025
    %v2210 = vunpack.c.h.b16 %v2025
    %v2211 = vunpack.c.l.b16 %v2026
    %v2212 = vunpack.c.h.b16 %v2026
    %v2213 = vunpack.c.l.b16 %v2027
    %v2214 = vunpack.c.h.b16 %v2027
    %v2215 = vunpack.c.l.b16 %v2028
    %v2216 = vunpack.c.h.b16 %v2028
    %v2217 = vunpack.c.l.b16 %v2029
    %v2218 = vunpack.c.h.b16 %v2029
    %v2219 = vunpack.c.l.b16 %v2030
    %v2220 = vunpack.c.h.b16 %v2030
    %v2221 = vunpack.c.l.b16 %v2031
    %v2222 = vunpack.c.h.b16 %v2031
    %v2223 = vunpack.c.l.b16 %v2032
    %v2224 = vunpack.c.h.b16 %v2032
    %v2225 = vunpack.c.l.b16 %v2033
    %v2226 = vunpack.c.h.b16 %v2033
    %v2227 = vunpack.c.l.b16 %v2034
    %v2228 = vunpack.c.h.b16 %v2034
    %v2229 = vunpack.c.l.b16 %v2035
    %v2230 = vunpack.c.h.b16 %v2035
    %v2231 = vunpack.c.l.b16 %v2036
    %v2232 = vunpack.c.h.b16 %v2036
    %v2233 = vunpack.c.l.b16 %v2037
    %v2234 = vunpack.c.h.b16 %v2037
    %v2235 = vunpack.c.l.b16 %v2038
    %v2236 = vunpack.c.h.b16 %v2038
    %v2237 = vunpack.c.l.b16 %v2039
    %v2238 = vunpack.c.h.b16 %v2039
    %v2239 = vunpack.c.l.b16 %v2040
    %v2240 = vunpack.c.h.b16 %v2040
    %v2241 = vunpack.c.l.b16 %v2041
    %v2242 = vunpack.c.h.b16 %v2041
    %v2243 = vunpack.c.l.b16 %v2042
    %v2244 = vunpack.c.h.b16 %v2042
    %v2245 = vunpack.c.l.b16 %v2043
    %v2246 = vunpack.c.h.b16 %v2043
    %v2247 = vunpack.c.l.b16 %v2044
    %v2248 = vunpack.c.h.b16 %v2044
    %v2249 = vpack.c.b16 %v2123, %v2121
    %v2250 = vpack.c.b16 %v2124, %v2122
    %v2251 = vpack.c.b16 %v2127, %v2125
    %v2252 = vpack.c.b16 %v2128, %v2126
    %v2253 = vpack.c.b16 %v2131, %v2129
    %v2254 = vpack.c.b16 %v2132, %v2130
    %v2255 = vpack.c.b16 %v2135, %v2133
    %v2256 = vpack.c.b16 %v2136, %v2134
    %v2257 = vpack.c.b16 %v2139, %v2137
    %v2258 = vpack.c.b16 %v2140, %v2138
    %v2259 = vpack.c.b16 %v2143, %v2141
    %v2260 = vpack.c.b16 %v2144, %v2142
    %v2261 = vpack.c.b16 %v2147, %v2145
    %v2262 = vpack.c.b16 %v2148, %v2146
    %v2263 = vpack.c.b16 %v2151, %v2149
    %v2264 = vpack.c.b16 %v2152, %v2150
    %v2265 = vpack.c.b16 %v2155, %v2153
    %v2266 = vpack.c.b16 %v2156, %v2154
    %v2267 = vpack.c.b16 %v2159, %v2157
    %v2268 = vpack.c.b16 %v2160, %v2158
    %v2269 = vpack.c.b16 %v2163, %v2161
    %v2270 = vpack.c.b16 %v2164, %v2162
    %v2271 = vpack.c.b16 %v2167, %v2165
    %v2272 = vpack.c.b16 %v2168, %v2166
    %v2273 = vpack.c.b16 %v2171, %v2169
    %v2274 = vpack.c.b16 %v2172, %v2170
    %v2275 = vpack.c.b16 %v2175, %v2173
    %v2276 = vpack.c.b16 %v2176, %v2174
    %v2277 = vpack.c.b16 %v2179, %v2177
    %v2278 = vpack.c.b16 %v2180, %v2178
    %v2279 = vpack.c.b16 %v2183, %v2181
    %v2280 = vpack.c.b16 %v2184, %v2182
    %v2281 = vpack.c.b16 %v2187, %v2185
    %v2282 = vpack.c.b16 %v2188, %v2186
    %v2283 = vpack.c.b16 %v2191, %v2189
    %v2284 = vpack.c.b16 %v2192, %v2190
    %v2285 = vpack.c.b16 %v2195, %v2193
    %v2286 = vpack.c.b16 %v2196, %v2194
    %v2287 = vpack.c.b16 %v2199, %v2197
    %v2288 = vpack.c.b16 %v2200, %v2198
    %v2289 = vpack.c.b16 %v2203, %v2201
    %v2290 = vpack.c.b16 %v2204, %v2202
    %v2291 = vpack.c.b16 %v2207, %v2205
    %v2292 = vpack.c.b16 %v2208, %v2206
    %v2293 = vpack.c.b16 %v2211, %v2209
    %v2294 = vpack.c.b16 %v2212, %v2210
    %v2295 = vpack.c.b16 %v2215, %v2213
    %v2296 = vpack.c.b16 %v2216, %v2214
    %v2297 = vpack.c.b16 %v2219, %v2217
    %v2298 = vpack.c.b16 %v2220, %v2218
    %v2299 = vpack.c.b16 %v2223, %v2221
    %v2300 = vpack.c.b16 %v2224, %v2222
    %v2301 = vpack.c.b16 %v2227, %v2225
    %v2302 = vpack.c.b16 %v2228, %v2226
    %v2303 = vpack.c.b16 %v2231, %v2229
    %v2304 = vpack.c.b16 %v2232, %v2230
    %v2305 = vpack.c.b16 %v2235, %v2233
    %v2306 = vpack.c.b16 %v2236, %v2234
    %v2307 = vpack.c.b16 %v2239, %v2237
    %v2308 = vpack.c.b16 %v2240, %v2238
    %v2309 = vpack.c.b16 %v2243, %v2241
    %v2310 = vpack.c.b16 %v2244, %v2242
    %v2311 = vpack.c.b16 %v2247, %v2245
    %v2312 = vpack.c.b16 %v2248, %v2246
    %2377 = vmatprep.subr.bf16.mxu0 %v2250
    %2378 = vmatpush1.bf16.msra.mxu0 %v2249
    %2379 = vmatprep.subr.bf16.mxu0 %v2252
    %2380 = vmatpush1.bf16.msra.mxu0 %v2251
    %2381 = vmatprep.subr.bf16.mxu0 %v2254
    %2382 = vmatpush1.bf16.msra.mxu0 %v2253
    %2383 = vmatprep.subr.bf16.mxu0 %v2256
    %2384 = vmatpush1.bf16.msra.mxu0 %v2255
    %2385 = vmatprep.subr.bf16.mxu0 %v2258
    %2386 = vmatpush1.bf16.msra.mxu0 %v2257
    %2387 = vmatprep.subr.bf16.mxu0 %v2260
    %2388 = vmatpush1.bf16.msra.mxu0 %v2259
    %2389 = vmatprep.subr.bf16.mxu0 %v2262
    %2390 = vmatpush1.bf16.msra.mxu0 %v2261
    %2391 = vmatprep.subr.bf16.mxu0 %v2264
    %2392 = vmatpush1.bf16.msra.mxu0 %v2263
    %2393 = vmatprep.subr.bf16.mxu0 %v2266
    %2394 = vmatpush1.bf16.msra.mxu0 %v2265
    %2395 = vmatprep.subr.bf16.mxu0 %v2268
    %2396 = vmatpush1.bf16.msra.mxu0 %v2267
    %2397 = vmatprep.subr.bf16.mxu0 %v2270
    %2398 = vmatpush1.bf16.msra.mxu0 %v2269
    %2399 = vmatprep.subr.bf16.mxu0 %v2272
    %2400 = vmatpush1.bf16.msra.mxu0 %v2271
    %2401 = vmatprep.subr.bf16.mxu0 %v2274
    %2402 = vmatpush1.bf16.msra.mxu0 %v2273
    %2403 = vmatprep.subr.bf16.mxu0 %v2276
    %2404 = vmatpush1.bf16.msra.mxu0 %v2275
    %2405 = vmatprep.subr.bf16.mxu0 %v2278
    %2406 = vmatpush1.bf16.msra.mxu0 %v2277
    %2407 = vmatprep.subr.bf16.mxu0 %v2280
    %2408 = vmatpush1.bf16.msra.mxu0 %v2279
    %2409 = vmatprep.mubr.bf16.mxu0 %v1978
    %2410 = vmatmul.mubr.bf16.gmra.mrb[0].mxu0 %v1977
    %v2411 = vpop.f32.mrb[0].mxu0
    %v2412 = vadd.f32 %v2050, %v2411
    %v2413 = vpop.f32.mrb[0].mxu0
    %v2414 = vadd.f32 %v2054, %v2413
    %v2415 = vpop.f32.mrb[0].mxu0
    %v2416 = vpop.f32.mrb[0].mxu0
    %2417 = vdwg.mxu0
    %2418 = vmatprep.subr.bf16.mxu0 %v2282
    %2419 = vmatpush1.bf16.msra.mxu0 %v2281
    %2420 = vmatprep.subr.bf16.mxu0 %v2284
    %2421 = vmatpush1.bf16.msra.mxu0 %v2283
    %2422 = vmatprep.subr.bf16.mxu0 %v2286
    %2423 = vmatpush1.bf16.msra.mxu0 %v2285
    %2424 = vmatprep.subr.bf16.mxu0 %v2288
    %2425 = vmatpush1.bf16.msra.mxu0 %v2287
    %2426 = vmatprep.subr.bf16.mxu0 %v2290
    %2427 = vmatpush1.bf16.msra.mxu0 %v2289
    %2428 = vmatprep.subr.bf16.mxu0 %v2292
    %2429 = vmatpush1.bf16.msra.mxu0 %v2291
    %2430 = vmatprep.subr.bf16.mxu0 %v2294
    %2431 = vmatpush1.bf16.msra.mxu0 %v2293
    %2432 = vmatprep.subr.bf16.mxu0 %v2296
    %2433 = vmatpush1.bf16.msra.mxu0 %v2295
    %2434 = vmatprep.subr.bf16.mxu0 %v2298
    %2435 = vmatpush1.bf16.msra.mxu0 %v2297
    %2436 = vmatprep.subr.bf16.mxu0 %v2300
    %2437 = vmatpush1.bf16.msra.mxu0 %v2299
    %2438 = vmatprep.subr.bf16.mxu0 %v2302
    %2439 = vmatpush1.bf16.msra.mxu0 %v2301
    %2440 = vmatprep.subr.bf16.mxu0 %v2304
    %2441 = vmatpush1.bf16.msra.mxu0 %v2303
    %2442 = vmatprep.subr.bf16.mxu0 %v2306
    %2443 = vmatpush1.bf16.msra.mxu0 %v2305
    %2444 = vmatprep.subr.bf16.mxu0 %v2308
    %2445 = vmatpush1.bf16.msra.mxu0 %v2307
    %2446 = vmatprep.subr.bf16.mxu0 %v2310
    %2447 = vmatpush1.bf16.msra.mxu0 %v2309
    %2448 = vmatprep.subr.bf16.mxu0 %v2312
    %2449 = vmatpush1.bf16.msra.mxu0 %v2311
    %2450 = vmatprep.mubr.bf16.mxu0 %v1980
    %2451 = vmatmul.mubr.bf16.gmra.mrb[0].mxu0 %v1979
    %v2452 = vpop.f32.mrb[0].mxu0
    %v2453 = vadd.f32 %v2412, %v2452
    %v2454 = vpop.f32.mrb[0].mxu0
    %v2455 = vadd.f32 %v2414, %v2454
    %v2456 = vpop.f32.mrb[0].mxu0
    %v2457 = vpop.f32.mrb[0].mxu0
    %2458 = vdwg.mxu0
    %v2459 = vmax.f32 %v2453, 0.0
    %v2460 = vmax.f32 %v2455, 0.0
    %v2461 = vpack.c.bf16 %v2459, %v2459
    %v2462 = vpack.c.bf16 %v2460, %v2460
    %v2463 = vld [vmem:[%s5] sm:$0xf]
    %v2464 = vld [vmem:[%s5 + $0x4] sm:$0xf]
    %v2465 = vld [vmem:[%s5 + $0x8] sm:$0xf]
    %v2466 = vld [vmem:[%s5 + $0xc] sm:$0xf]
    %v2467 = vld [vmem:[%s5 + $0x10] sm:$0xf]
    %v2468 = vld [vmem:[%s5 + $0x14] sm:$0xf]
    %v2469 = vld [vmem:[%s5 + $0x18] sm:$0xf]
    %v2470 = vld [vmem:[%s5 + $0x1c] sm:$0xf]
    %v2471 = vld [vmem:[%s5 + $0x20] sm:$0xf]
    %v2472 = vld [vmem:[%s5 + $0x24] sm:$0xf]
    %v2473 = vld [vmem:[%s5 + $0x28] sm:$0xf]
    %v2474 = vld [vmem:[%s5 + $0x2c] sm:$0xf]
    %v2475 = vld [vmem:[%s5 + $0x30] sm:$0xf]
    %v2476 = vld [vmem:[%s5 + $0x34] sm:$0xf]
    %v2477 = vld [vmem:[%s5 + $0x38] sm:$0xf]
    %v2478 = vld [vmem:[%s5 + $0x3c] sm:$0xf]
    %v2479 = vld [vmem:[%s5 + $0x40] sm:$0xf]
    %v2480 = vld [vmem:[%s5 + $0x44] sm:$0xf]
    %v2481 = vld [vmem:[%s5 + $0x48] sm:$0xf]
    %v2482 = vld [vmem:[%s5 + $0x4c] sm:$0xf]
    %v2483 = vld [vmem:[%s5 + $0x50] sm:$0xf]
    %v2484 = vld [vmem:[%s5 + $0x54] sm:$0xf]
    %v2485 = vld [vmem:[%s5 + $0x58] sm:$0xf]
    %v2486 = vld [vmem:[%s5 + $0x5c] sm:$0xf]
    %v2487 = vld [vmem:[%s5 + $0x60] sm:$0xf]
    %v2488 = vld [vmem:[%s5 + $0x64] sm:$0xf]
    %v2489 = vld [vmem:[%s5 + $0x68] sm:$0xf]
    %v2490 = vld [vmem:[%s5 + $0x6c] sm:$0xf]
    %v2491 = vld [vmem:[%s5 + $0x70] sm:$0xf]
    %v2492 = vld [vmem:[%s5 + $0x74] sm:$0xf]
    %v2493 = vld [vmem:[%s5 + $0x78] sm:$0xf]
    %v2494 = vld [vmem:[%s5 + $0x7c] sm:$0xf]
    %v2495 = vld [vmem:[%s6] sm:$0x1]
    %v2497 = vlaneseq
    %v2498 = vshrl.u32 %v2497, 7
    %v2499 = vsub.s32 0, %v2498
    %v2500 = vrot.slane %v2495, %v2499
    %v2534 = vunpack.c.l.b16 %v2463
    %v2535 = vunpack.c.l.b16 %v2464
    %v2536 = vunpack.c.l.b16 %v2465
    %v2537 = vunpack.c.l.b16 %v2466
    %v2538 = vunpack.c.l.b16 %v2467
    %v2539 = vunpack.c.l.b16 %v2468
    %v2540 = vunpack.c.l.b16 %v2469
    %v2541 = vunpack.c.l.b16 %v2470
    %v2542 = vunpack.c.l.b16 %v2471
    %v2543 = vunpack.c.l.b16 %v2472
    %v2544 = vunpack.c.l.b16 %v2473
    %v2545 = vunpack.c.l.b16 %v2474
    %v2546 = vunpack.c.l.b16 %v2475
    %v2547 = vunpack.c.l.b16 %v2476
    %v2548 = vunpack.c.l.b16 %v2477
    %v2549 = vunpack.c.l.b16 %v2478
    %v2550 = vunpack.c.l.b16 %v2479
    %v2551 = vunpack.c.l.b16 %v2480
    %v2552 = vunpack.c.l.b16 %v2481
    %v2553 = vunpack.c.l.b16 %v2482
    %v2554 = vunpack.c.l.b16 %v2483
    %v2555 = vunpack.c.l.b16 %v2484
    %v2556 = vunpack.c.l.b16 %v2485
    %v2557 = vunpack.c.l.b16 %v2486
    %v2558 = vunpack.c.l.b16 %v2487
    %v2559 = vunpack.c.l.b16 %v2488
    %v2560 = vunpack.c.l.b16 %v2489
    %v2561 = vunpack.c.l.b16 %v2490
    %v2562 = vunpack.c.l.b16 %v2491
    %v2563 = vunpack.c.l.b16 %v2492
    %v2564 = vunpack.c.l.b16 %v2493
    %v2565 = vunpack.c.l.b16 %v2494
    %v2566 = vpack.c.b16 %v2535, %v2534
    %v2567 = vpack.c.b16 %v2537, %v2536
    %v2568 = vpack.c.b16 %v2539, %v2538
    %v2569 = vpack.c.b16 %v2541, %v2540
    %v2570 = vpack.c.b16 %v2543, %v2542
    %v2571 = vpack.c.b16 %v2545, %v2544
    %v2572 = vpack.c.b16 %v2547, %v2546
    %v2573 = vpack.c.b16 %v2549, %v2548
    %v2574 = vpack.c.b16 %v2551, %v2550
    %v2575 = vpack.c.b16 %v2553, %v2552
    %v2576 = vpack.c.b16 %v2555, %v2554
    %v2577 = vpack.c.b16 %v2557, %v2556
    %v2578 = vpack.c.b16 %v2559, %v2558
    %v2579 = vpack.c.b16 %v2561, %v2560
    %v2580 = vpack.c.b16 %v2563, %v2562
    %v2581 = vpack.c.b16 %v2565, %v2564
    %2598 = vmatprep.subr.bf16.mxu0 0
    %2599 = vmatpush1.bf16.msra.mxu0 %v2566
    %2600 = vmatprep.subr.bf16.mxu0 0
    %2601 = vmatpush1.bf16.msra.mxu0 %v2567
    %2602 = vmatprep.subr.bf16.mxu0 0
    %2603 = vmatpush1.bf16.msra.mxu0 %v2568
    %2604 = vmatprep.subr.bf16.mxu0 0
    %2605 = vmatpush1.bf16.msra.mxu0 %v2569
    %2606 = vmatprep.subr.bf16.mxu0 0
    %2607 = vmatpush1.bf16.msra.mxu0 %v2570
    %2608 = vmatprep.subr.bf16.mxu0 0
    %2609 = vmatpush1.bf16.msra.mxu0 %v2571
    %2610 = vmatprep.subr.bf16.mxu0 0
    %2611 = vmatpush1.bf16.msra.mxu0 %v2572
    %2612 = vmatprep.subr.bf16.mxu0 0
    %2613 = vmatpush1.bf16.msra.mxu0 %v2573
    %2614 = vmatprep.subr.bf16.mxu0 0
    %2615 = vmatpush1.bf16.msra.mxu0 %v2574
    %2616 = vmatprep.subr.bf16.mxu0 0
    %2617 = vmatpush1.bf16.msra.mxu0 %v2575
    %2618 = vmatprep.subr.bf16.mxu0 0
    %2619 = vmatpush1.bf16.msra.mxu0 %v2576
    %2620 = vmatprep.subr.bf16.mxu0 0
    %2621 = vmatpush1.bf16.msra.mxu0 %v2577
    %2622 = vmatprep.subr.bf16.mxu0 0
    %2623 = vmatpush1.bf16.msra.mxu0 %v2578
    %2624 = vmatprep.subr.bf16.mxu0 0
    %2625 = vmatpush1.bf16.msra.mxu0 %v2579
    %2626 = vmatprep.subr.bf16.mxu0 0
    %2627 = vmatpush1.bf16.msra.mxu0 %v2580
    %2628 = vmatprep.subr.bf16.mxu0 0
    %2629 = vmatpush1.bf16.msra.mxu0 %v2581
    %2630 = vmatprep.mubr.bf16.mxu0 %v2462
    %2631 = vmatmul.mubr.bf16.gmra.mrb[0].mxu0 %v2461
    %v2632 = vpop.f32.mrb[0].mxu0
    %v2633 = vadd.f32 %v2500, %v2632
    %v2634 = vpop.f32.mrb[0].mxu0
    %v2635 = vpop.f32.mrb[0].mxu0
    %v2636 = vpop.f32.mrb[0].mxu0
    %2637 = vdwg.mxu0
    %2638 = vst [vmem:[%s7] sm:$0xff] %v2633
    // Predicated region
    $region38: #{fcnn_forward.1} parent=1 // pred_check
      _
    $region39: #{fcnn_forward.1} parent=1 // pred_check_branch
      %2640 = sbr.rel (0) target = $region41
    $region40: #{fcnn_forward.1} parent=1 // pred_region
      _
    $region41: #{fcnn_forward.1} parent=1 // pred_fallthru
      _
    // Predicated region
    $region42: #{fcnn_forward.1} parent=1 // pred_check
      _
    $region43: #{fcnn_forward.1} parent=1 // pred_check_branch
      %2642 = sbr.rel (0) target = $region45
    $region44: #{fcnn_forward.1} parent=1 // pred_region
      _
    $region45: #{fcnn_forward.1} parent=1 // pred_fallthru
      _
    %2643 = vsyncpa [#allocation3], 1
    %2644 = vsyncpa [#allocation5], 1

</llo_original>
